<compile_context>
chip_gen: v7x
topology: tpu7x:2x2x1
jax: 0.10.0
libtpu: 0.0.40
codegen_flags: <defaults>
</compile_context>

<pallas_src>
import functools

import jax
import jax.numpy as jnp
from jax import lax
from jax.experimental import pallas as pl
from jax.experimental.pallas import tpu as pltpu


def _round_up(x: int, m: int) -> int:
    return ((x + m - 1) // m) * m


def _entailment_memory_kernel(x_ref, w_ref, b_ref, mem_ref, z_ref, attn_ref):
    # x:   [TB, H]  (current batch tile)
    # w:   [K, H]   (PyTorch nn.Linear weight layout, resident across steps)
    # b:   [1, K]   (resident)
    # mem: [K, H]   (resident)
    x = x_ref[...]
    w = w_ref[...]
    b = b_ref[...].astype(jnp.float32)
    mem = mem_ref[...].astype(jnp.float32)

    # logits = x @ w.T + b  -> [TB, K]; contraction expressed on w's last axis
    # so Mosaic feeds the MXU without materializing w.T.  Operand dtypes pass
    # through (bf16 inputs -> bf16-native MXU on v6e/v7x); accumulate in f32.
    logits = lax.dot_general(
        x, w,
        dimension_numbers=(((1,), (1,)), ((), ())),
        preferred_element_type=jnp.float32,
    ) + b

    # Numerically-stable softmax along the slot axis, all in f32.
    m = jnp.max(logits, axis=-1, keepdims=True)
    e = jnp.exp(logits - m)
    denom = jnp.sum(e, axis=-1, keepdims=True)
    # EUP approximate reciprocal (free slot next to the exp) + one
    # Newton-Raphson refinement on the VPU to recover ~f32 accuracy.
    inv = pl.reciprocal(denom, approx=True)
    inv = inv * (2.0 - denom * inv)
    attn = e * inv  # [TB, K] f32

    # z = attn @ memory, but the contraction depth is only K (=8), which is a
    # terrible MXU shape.  Unroll it as K VPU broadcast-FMAs instead (static
    # Python loop; the mem-row broadcasts are not inside any runtime loop).
    num_slots = mem.shape[0]
    z = attn[:, 0:1] * mem[0:1, :]
    for k in range(1, num_slots):
        z = z + attn[:, k:k + 1] * mem[k:k + 1, :]

    z_ref[...] = z.astype(z_ref.dtype)
    attn_ref[...] = attn.astype(attn_ref.dtype)


@functools.partial(jax.jit, static_argnames=("block_b", "max_single_block"))
def entailment_memory_forward(hidden_state, proj_w, proj_b, memory, *,
                              block_b=512, max_single_block=2048):
    """Fused EntailmentMemory forward.

    Args:
      hidden_state: [B, H] float32 (or bfloat16 for v6e/v7x MXU throughput)
      proj_w:       [K, H] (nn.Linear weight layout)
      proj_b:       [K]    (nn.Linear bias)
      memory:       [K, H]
      block_b:      batch-tile rows per grid step for large B (multiple of 8)
      max_single_block: B at or below this runs as a single un-padded block
    Returns:
      (z [B, H], attn_weights [B, K]) in hidden_state.dtype
    """
    B, H = hidden_state.shape
    K = memory.shape[0]
    out_dtype = hidden_state.dtype
    proj_b2d = proj_b.reshape(1, K)

    if B <= max_single_block:
        # One grid step, block == full array: no (8,128) constraint, no pad,
        # no output slicing.  Removes all per-step and padding overhead at the
        # module's typical (small-B) shapes.
        tb = B
    else:
        # Large B: big tiles (~85% of HBM roofline at 512-1024 rows) and
        # >=2 grid steps so v7x's two TensorCores can split the parallel axis.
        tb = _round_up(min(block_b, B), 8)

    Bp = _round_up(B, tb)  # == B on the single-block path
    if Bp != B:
        # Rare ragged-large-B fallback only.
        hidden_state = jnp.pad(hidden_state, ((0, Bp - B), (0, 0)))
    grid = (Bp // tb,)

    z, attn = pl.pallas_call(
        _entailment_memory_kernel,
        out_shape=(
            jax.ShapeDtypeStruct((Bp, H), out_dtype),
            jax.ShapeDtypeStruct((Bp, K), out_dtype),
        ),
        grid=grid,
        in_specs=[
            pl.BlockSpec((tb, H), lambda i: (i, 0)),   # hidden_state tile
            pl.BlockSpec((K, H), lambda i: (0, 0)),    # proj weight (resident)
            pl.BlockSpec((1, K), lambda i: (0, 0)),    # proj bias   (resident)
            pl.BlockSpec((K, H), lambda i: (0, 0)),    # memory      (resident)
        ],
        out_specs=[
            pl.BlockSpec((tb, H), lambda i: (i, 0)),   # z tile
            pl.BlockSpec((tb, K), lambda i: (i, 0)),   # attn tile
        ],
        compiler_params=pltpu.CompilerParams(
            dimension_semantics=("parallel",),
        ),
    )(hidden_state, proj_w, proj_b2d, memory)

    if Bp != B:
        z = z[:B]
        attn = attn[:B]
    return z, attn


def _reference(hidden_state, proj_w, proj_b, memory):
    logits = hidden_state.astype(jnp.float32) @ proj_w.T.astype(jnp.float32) + proj_b
    attn = jax.nn.softmax(logits, axis=-1)
    z = attn @ memory.astype(jnp.float32)
    return z, attn


def _check(batch, hidden_dim, num_slots, key):
    k1, k2, k3, k4 = jax.random.split(key, 4)
    memory = jax.random.normal(k1, (num_slots, hidden_dim), dtype=jnp.float32)
    bound = 1.0 / (hidden_dim ** 0.5)
    proj_w = jax.random.uniform(
        k2, (num_slots, hidden_dim), minval=-bound, maxval=bound, dtype=jnp.float32)
    proj_b = jax.random.uniform(
        k3, (num_slots,), minval=-bound, maxval=bound, dtype=jnp.float32)
    hidden_state = jax.random.normal(k4, (batch, hidden_dim), dtype=jnp.float32)

    z, attn = entailment_memory_forward(hidden_state, proj_w, proj_b, memory)
    z = jax.block_until_ready(z)
    attn = jax.block_until_ready(attn)

    z_ref, attn_ref = _reference(hidden_state, proj_w, proj_b, memory)
    assert z.shape == (batch, hidden_dim) and attn.shape == (batch, num_slots)
    assert jnp.allclose(z, z_ref, atol=1e-5, rtol=1e-5), "z mismatch"
    assert jnp.allclose(attn, attn_ref, atol=1e-5, rtol=1e-5), "attn mismatch"
    assert jnp.allclose(jnp.sum(attn, axis=-1), 1.0, atol=1e-5, rtol=1e-5)


if __name__ == "__main__":
    # Shapes consistent with the module: hidden_dim=32, num_slots=8.
    hidden_dim = 32
    num_slots = 8
    key = jax.random.PRNGKey(0)
    k_small, k_large = jax.random.split(key)

    # Primary (small-B) case: batch=200 -> single grid step, no padding.
    _check(200, hidden_dim, num_slots, k_small)
    # Large-B tiled path (exercises block_b tiling + ragged pad fallback).
    _check(2600, hidden_dim, num_slots, k_large)

    print("KERNEL_OK")
</pallas_src>

<mosaic_0001>
module attributes {stable_mosaic.version = 11 : i64} {
  func.func @_entailment_memory_kernel(%arg0: i32, %arg1: memref<200x32xf32, #tpu.memory_space<vmem>>, %arg2: memref<8x32xf32, #tpu.memory_space<vmem>>, %arg3: memref<1x8xf32, #tpu.memory_space<vmem>>, %arg4: memref<8x32xf32, #tpu.memory_space<vmem>>, %arg5: memref<200x32xf32, #tpu.memory_space<vmem>>, %arg6: memref<200x8xf32, #tpu.memory_space<vmem>>) attributes {dimension_semantics = [#tpu.dimension_semantics<parallel>], iteration_bounds = array<i64: 1>, scalar_prefetch = 0 : i64, scratch_operands = 0 : i64, tpu.core_type = #tpu.core_type<tc>, window_params = [{transform_indices = @transform_0, window_bounds = array<i64: 200, 32>}, {pipeline_mode = #tpu.pipeline_mode<synchronous>, transform_indices = @transform_1, window_bounds = array<i64: 8, 32>}, {pipeline_mode = #tpu.pipeline_mode<synchronous>, transform_indices = @transform_2, window_bounds = array<i64: 1, 8>}, {pipeline_mode = #tpu.pipeline_mode<synchronous>, transform_indices = @transform_3, window_bounds = array<i64: 8, 32>}, {transform_indices = @transform_4, window_bounds = array<i64: 200, 32>}, {transform_indices = @transform_5, window_bounds = array<i64: 200, 8>}]} {
    %c0 = arith.constant 0 : index
    %c0_0 = arith.constant 0 : index
    %0 = vector.load %arg1[%c0, %c0_0] : memref<200x32xf32, #tpu.memory_space<vmem>>, vector<200x32xf32>
    %c0_1 = arith.constant 0 : index
    %c0_2 = arith.constant 0 : index
    %1 = vector.load %arg2[%c0_1, %c0_2] : memref<8x32xf32, #tpu.memory_space<vmem>>, vector<8x32xf32>
    %c0_3 = arith.constant 0 : index
    %c0_4 = arith.constant 0 : index
    %2 = vector.load %arg3[%c0_3, %c0_4] : memref<1x8xf32, #tpu.memory_space<vmem>>, vector<1x8xf32>
    %c0_5 = arith.constant 0 : index
    %c0_6 = arith.constant 0 : index
    %3 = vector.load %arg4[%c0_5, %c0_6] : memref<8x32xf32, #tpu.memory_space<vmem>>, vector<8x32xf32>
    %cst = arith.constant dense<0.000000e+00> : vector<200x8xf32>
    %4 = tpu.matmul %0, %1, %cst {dimension_numbers = #tpu.dot_dimension_numbers<[1], [1], [0], [0], [0, 0, 1, 0], [], []>} : vector<200x32xf32>, vector<8x32xf32>, vector<200x8xf32> -> vector<200x8xf32>
    %5 = vector.broadcast %2 : vector<1x8xf32> to vector<200x8xf32>
    %6 = arith.addf %4, %5 : vector<200x8xf32>
    %cst_7 = arith.constant dense<0xFF800000> : vector<200xf32>
    %7 = vector.multi_reduction <maximumf>, %6, %cst_7 [1] : vector<200x8xf32> to vector<200xf32>
    %8 = vector.shape_cast %7 : vector<200xf32> to vector<200x1xf32>
    %9 = vector.broadcast %8 : vector<200x1xf32> to vector<200x8xf32>
    %10 = arith.subf %6, %9 : vector<200x8xf32>
    %11 = math.exp %10 : vector<200x8xf32>
    %cst_8 = arith.constant dense<0.000000e+00> : vector<200xf32>
    %12 = vector.multi_reduction <add>, %11, %cst_8 [1] : vector<200x8xf32> to vector<200xf32>
    %13 = vector.shape_cast %12 : vector<200xf32> to vector<200x1xf32>
    %14 = tpu.reciprocal %13 {approx = true} : vector<200x1xf32> -> vector<200x1xf32>
    %15 = arith.mulf %13, %14 : vector<200x1xf32>
    %cst_9 = arith.constant 2.000000e+00 : f32
    %16 = vector.broadcast %cst_9 : f32 to vector<200x1xf32>
    %17 = arith.subf %16, %15 : vector<200x1xf32>
    %18 = arith.mulf %14, %17 : vector<200x1xf32>
    %19 = vector.broadcast %18 : vector<200x1xf32> to vector<200x8xf32>
    %20 = arith.mulf %11, %19 : vector<200x8xf32>
    %21 = vector.extract_strided_slice %20 {offsets = [0, 0], sizes = [200, 1], strides = [1, 1]} : vector<200x8xf32> to vector<200x1xf32>
    %22 = vector.extract_strided_slice %3 {offsets = [0, 0], sizes = [1, 32], strides = [1, 1]} : vector<8x32xf32> to vector<1x32xf32>
    %23 = vector.broadcast %21 : vector<200x1xf32> to vector<200x32xf32>
    %24 = vector.broadcast %22 : vector<1x32xf32> to vector<200x32xf32>
    %25 = arith.mulf %23, %24 : vector<200x32xf32>
    %26 = vector.extract_strided_slice %20 {offsets = [0, 1], sizes = [200, 1], strides = [1, 1]} : vector<200x8xf32> to vector<200x1xf32>
    %27 = vector.extract_strided_slice %3 {offsets = [1, 0], sizes = [1, 32], strides = [1, 1]} : vector<8x32xf32> to vector<1x32xf32>
    %28 = vector.broadcast %26 : vector<200x1xf32> to vector<200x32xf32>
    %29 = vector.broadcast %27 : vector<1x32xf32> to vector<200x32xf32>
    %30 = arith.mulf %28, %29 : vector<200x32xf32>
    %31 = arith.addf %25, %30 : vector<200x32xf32>
    %32 = vector.extract_strided_slice %20 {offsets = [0, 2], sizes = [200, 1], strides = [1, 1]} : vector<200x8xf32> to vector<200x1xf32>
    %33 = vector.extract_strided_slice %3 {offsets = [2, 0], sizes = [1, 32], strides = [1, 1]} : vector<8x32xf32> to vector<1x32xf32>
    %34 = vector.broadcast %32 : vector<200x1xf32> to vector<200x32xf32>
    %35 = vector.broadcast %33 : vector<1x32xf32> to vector<200x32xf32>
    %36 = arith.mulf %34, %35 : vector<200x32xf32>
    %37 = arith.addf %31, %36 : vector<200x32xf32>
    %38 = vector.extract_strided_slice %20 {offsets = [0, 3], sizes = [200, 1], strides = [1, 1]} : vector<200x8xf32> to vector<200x1xf32>
    %39 = vector.extract_strided_slice %3 {offsets = [3, 0], sizes = [1, 32], strides = [1, 1]} : vector<8x32xf32> to vector<1x32xf32>
    %40 = vector.broadcast %38 : vector<200x1xf32> to vector<200x32xf32>
    %41 = vector.broadcast %39 : vector<1x32xf32> to vector<200x32xf32>
    %42 = arith.mulf %40, %41 : vector<200x32xf32>
    %43 = arith.addf %37, %42 : vector<200x32xf32>
    %44 = vector.extract_strided_slice %20 {offsets = [0, 4], sizes = [200, 1], strides = [1, 1]} : vector<200x8xf32> to vector<200x1xf32>
    %45 = vector.extract_strided_slice %3 {offsets = [4, 0], sizes = [1, 32], strides = [1, 1]} : vector<8x32xf32> to vector<1x32xf32>
    %46 = vector.broadcast %44 : vector<200x1xf32> to vector<200x32xf32>
    %47 = vector.broadcast %45 : vector<1x32xf32> to vector<200x32xf32>
    %48 = arith.mulf %46, %47 : vector<200x32xf32>
    %49 = arith.addf %43, %48 : vector<200x32xf32>
    %50 = vector.extract_strided_slice %20 {offsets = [0, 5], sizes = [200, 1], strides = [1, 1]} : vector<200x8xf32> to vector<200x1xf32>
    %51 = vector.extract_strided_slice %3 {offsets = [5, 0], sizes = [1, 32], strides = [1, 1]} : vector<8x32xf32> to vector<1x32xf32>
    %52 = vector.broadcast %50 : vector<200x1xf32> to vector<200x32xf32>
    %53 = vector.broadcast %51 : vector<1x32xf32> to vector<200x32xf32>
    %54 = arith.mulf %52, %53 : vector<200x32xf32>
    %55 = arith.addf %49, %54 : vector<200x32xf32>
    %56 = vector.extract_strided_slice %20 {offsets = [0, 6], sizes = [200, 1], strides = [1, 1]} : vector<200x8xf32> to vector<200x1xf32>
    %57 = vector.extract_strided_slice %3 {offsets = [6, 0], sizes = [1, 32], strides = [1, 1]} : vector<8x32xf32> to vector<1x32xf32>
    %58 = vector.broadcast %56 : vector<200x1xf32> to vector<200x32xf32>
    %59 = vector.broadcast %57 : vector<1x32xf32> to vector<200x32xf32>
    %60 = arith.mulf %58, %59 : vector<200x32xf32>
    %61 = arith.addf %55, %60 : vector<200x32xf32>
    %62 = vector.extract_strided_slice %20 {offsets = [0, 7], sizes = [200, 1], strides = [1, 1]} : vector<200x8xf32> to vector<200x1xf32>
    %63 = vector.extract_strided_slice %3 {offsets = [7, 0], sizes = [1, 32], strides = [1, 1]} : vector<8x32xf32> to vector<1x32xf32>
    %64 = vector.broadcast %62 : vector<200x1xf32> to vector<200x32xf32>
    %65 = vector.broadcast %63 : vector<1x32xf32> to vector<200x32xf32>
    %66 = arith.mulf %64, %65 : vector<200x32xf32>
    %67 = arith.addf %61, %66 : vector<200x32xf32>
    %c0_10 = arith.constant 0 : index
    %c0_11 = arith.constant 0 : index
    %68 = vector.load %arg5[%c0_10, %c0_11] : memref<200x32xf32, #tpu.memory_space<vmem>>, vector<200x32xf32>
    tpu.vector_store %arg5[%c0_10, %c0_11], %67 {strides = array<i32>} : memref<200x32xf32, #tpu.memory_space<vmem>>, vector<200x32xf32>,
    %c0_12 = arith.constant 0 : index
    %c0_13 = arith.constant 0 : index
    %69 = vector.load %arg6[%c0_12, %c0_13] : memref<200x8xf32, #tpu.memory_space<vmem>>, vector<200x8xf32>
    tpu.vector_store %arg6[%c0_12, %c0_13], %20 {strides = array<i32>} : memref<200x8xf32, #tpu.memory_space<vmem>>, vector<200x8xf32>,
    return
  }
  func.func @transform_0(%arg0: i32) -> (i32, i32) {
    %c0_i32 = arith.constant 0 : i32
    %c0_i32_0 = arith.constant 0 : i32
    return %arg0, %c0_i32 : i32, i32
  }
  func.func @transform_1(%arg0: i32) -> (i32, i32) {
    %c0_i32 = arith.constant 0 : i32
    %c0_i32_0 = arith.constant 0 : i32
    %c0_i32_1 = arith.constant 0 : i32
    return %c0_i32, %c0_i32_0 : i32, i32
  }
  func.func @transform_2(%arg0: i32) -> (i32, i32) {
    %c0_i32 = arith.constant 0 : i32
    %c0_i32_0 = arith.constant 0 : i32
    %c0_i32_1 = arith.constant 0 : i32
    return %c0_i32, %c0_i32_0 : i32, i32
  }
  func.func @transform_3(%arg0: i32) -> (i32, i32) {
    %c0_i32 = arith.constant 0 : i32
    %c0_i32_0 = arith.constant 0 : i32
    %c0_i32_1 = arith.constant 0 : i32
    return %c0_i32, %c0_i32_0 : i32, i32
  }
  func.func @transform_4(%arg0: i32) -> (i32, i32) {
    %c0_i32 = arith.constant 0 : i32
    %c0_i32_0 = arith.constant 0 : i32
    return %arg0, %c0_i32 : i32, i32
  }
  func.func @transform_5(%arg0: i32) -> (i32, i32) {
    %c0_i32 = arith.constant 0 : i32
    %c0_i32_0 = arith.constant 0 : i32
    return %arg0, %c0_i32 : i32, i32
  }
}

</mosaic_0001>

<llo_original>
// kernel: entailment_memory_forward.1
$region0: #{entailment_memory_forward.1}
  #allocation0 [shape = 'u32[]', space=smem, size = 0x4, offset = 0x4, fixed_abs, tag = 'smem constant byte address 0x4 - core index']
  #allocation1 [shape = 'u32[144,128]{1,0:T(1,128)}', space=vmem, size = 0x12000, scoped, tag = 'internal scratch']
  %s0 = inlined_call_operand.vmem [shape: f32[200,32], index: 0, kind: input, shape index: {}]
  %s1 = inlined_call_operand.vmem [shape: f32[8,32], index: 1, kind: input, shape index: {}]
  %s2 = inlined_call_operand.vmem [shape: f32[1,8], index: 2, kind: input, shape index: {}]
  %s3 = inlined_call_operand.vmem [shape: f32[8,32], index: 3, kind: input, shape index: {}]
  %s4 = inlined_call_operand.vmem [shape: f32[200,32], index: 4, kind: output, shape index: {0}]
  %s5 = inlined_call_operand.vmem [shape: f32[200,8], index: 5, kind: output, shape index: {1}]
  %6 = xla_tuple %s4, %s5
  %s7 = sld [smem:[#allocation0]]
  $region34: #{entailment_memory_forward.1} parent=0
    _
  %s9 = ssub.s32 1, %s7
  %s10 = scalar_select 0, %s9, %s7
  // Predicated region
  $region2: #{entailment_memory_forward.1} parent=0 // pred_check
    _
  $region3: #{entailment_memory_forward.1} parent=0 // pred_check_branch
    %12 = sbr.rel (0) target = $region5
  $region4: #{entailment_memory_forward.1} parent=0 // pred_region
    _
  $region5: #{entailment_memory_forward.1} parent=0 // pred_fallthru
    _
  // Predicated region
  $region6: #{entailment_memory_forward.1} parent=0 // pred_check
    _
  $region7: #{entailment_memory_forward.1} parent=0 // pred_check_branch
    %14 = sbr.rel (0) target = $region9
  $region8: #{entailment_memory_forward.1} parent=0 // pred_region
    _
  $region9: #{entailment_memory_forward.1} parent=0 // pred_fallthru
    _
  // Predicated region
  $region10: #{entailment_memory_forward.1} parent=0 // pred_check
    _
  $region11: #{entailment_memory_forward.1} parent=0 // pred_check_branch
    %16 = sbr.rel (0) target = $region13
  $region12: #{entailment_memory_forward.1} parent=0 // pred_region
    _
  $region13: #{entailment_memory_forward.1} parent=0 // pred_fallthru
    _
  // Predicated region
  $region14: #{entailment_memory_forward.1} parent=0 // pred_check
    _
  $region15: #{entailment_memory_forward.1} parent=0 // pred_check_branch
    %18 = sbr.rel (0) target = $region17
  $region16: #{entailment_memory_forward.1} parent=0 // pred_region
    _
  $region17: #{entailment_memory_forward.1} parent=0 // pred_fallthru
    _
  %v19 = vld [vmem:[%s0] sm:$0xff]
  %v20 = vld [vmem:[%s0 + $0x8] sm:$0xff]
  %v21 = vld [vmem:[%s0 + $0x10] sm:$0xff]
  %v22 = vld [vmem:[%s0 + $0x18] sm:$0xff]
  %v23 = vld [vmem:[%s0 + $0x20] sm:$0xff]
  %v24 = vld [vmem:[%s0 + $0x28] sm:$0xff]
  %v25 = vld [vmem:[%s0 + $0x30] sm:$0xff]
  %v26 = vld [vmem:[%s0 + $0x38] sm:$0xff]
  %v27 = vld [vmem:[%s0 + $0x40] sm:$0xff]
  %v28 = vld [vmem:[%s0 + $0x48] sm:$0xff]
  %v29 = vld [vmem:[%s0 + $0x50] sm:$0xff]
  %v30 = vld [vmem:[%s0 + $0x58] sm:$0xff]
  %v31 = vld [vmem:[%s0 + $0x60] sm:$0xff]
  %v32 = vld [vmem:[%s0 + $0x68] sm:$0xff]
  %v33 = vld [vmem:[%s0 + $0x70] sm:$0xff]
  %v34 = vld [vmem:[%s0 + $0x78] sm:$0xff]
  %v35 = vld [vmem:[%s0 + $0x80] sm:$0xff]
  %v36 = vld [vmem:[%s0 + $0x88] sm:$0xff]
  %v37 = vld [vmem:[%s0 + $0x90] sm:$0xff]
  %v38 = vld [vmem:[%s0 + $0x98] sm:$0xff]
  %v39 = vld [vmem:[%s0 + $0xa0] sm:$0xff]
  %v40 = vld [vmem:[%s0 + $0xa8] sm:$0xff]
  %v41 = vld [vmem:[%s0 + $0xb0] sm:$0xff]
  %v42 = vld [vmem:[%s0 + $0xb8] sm:$0xff]
  %v43 = vld [vmem:[%s0 + $0xc0] sm:$0xff]
  %v44 = vld [vmem:[%s1] sm:$0xff]
  %v45 = vld [vmem:[%s2] sm:$0x1]
  %v46 = vld [vmem:[%s3] sm:$0xff]
  %v48 = vlaneseq
  %v49 = vshrl.u32 %v48, 7
  %v50 = vsub.s32 0, %v49
  %v51 = vrot.slane %v45, %v50
  %vm53 = vcmask 261120
  %v55 = vsel %vm53, %v19, 0
  %v58 = vsel %vm53, %v20, 0
  %v61 = vsel %vm53, %v21, 0
  %v64 = vsel %vm53, %v22, 0
  %v67 = vsel %vm53, %v23, 0
  %v70 = vsel %vm53, %v24, 0
  %v73 = vsel %vm53, %v25, 0
  %v76 = vsel %vm53, %v26, 0
  %v79 = vsel %vm53, %v27, 0
  %v82 = vsel %vm53, %v28, 0
  %v85 = vsel %vm53, %v29, 0
  %v88 = vsel %vm53, %v30, 0
  %v91 = vsel %vm53, %v31, 0
  %v94 = vsel %vm53, %v32, 0
  %v97 = vsel %vm53, %v33, 0
  %v100 = vsel %vm53, %v34, 0
  %v103 = vsel %vm53, %v35, 0
  %v106 = vsel %vm53, %v36, 0
  %v109 = vsel %vm53, %v37, 0
  %v112 = vsel %vm53, %v38, 0
  %v115 = vsel %vm53, %v39, 0
  %v118 = vsel %vm53, %v40, 0
  %v121 = vsel %vm53, %v41, 0
  %v124 = vsel %vm53, %v42, 0
  %v127 = vsel %vm53, %v43, 0
  %v130 = vsel %vm53, %v44, 0
  %132 = vmatprep.subr.mxu0 0.0
  %133 = vmatpush1.xpose.msra.mxu0 %v130
  %134 = vmatprep.subr.mxu0 0.0
  %135 = vmatpush1.xpose.msra.mxu0 0.0
  %136 = vmatprep.subr.mxu0 0.0
  %137 = vmatpush1.xpose.msra.mxu0 0.0
  %138 = vmatprep.subr.mxu0 0.0
  %139 = vmatpush1.xpose.msra.mxu0 0.0
  %140 = vmatprep.subr.mxu0 0.0
  %141 = vmatpush1.xpose.msra.mxu0 0.0
  %142 = vmatprep.subr.mxu0 0.0
  %143 = vmatpush1.xpose.msra.mxu0 0.0
  %144 = vmatprep.subr.mxu0 0.0
  %145 = vmatpush1.xpose.msra.mxu0 0.0
  %146 = vmatprep.subr.mxu0 0.0
  %147 = vmatpush1.xpose.msra.mxu0 0.0
  %148 = vmatprep.subr.mxu0 0.0
  %149 = vmatpush1.xpose.msra.mxu0 0.0
  %150 = vmatprep.subr.mxu0 0.0
  %151 = vmatpush1.xpose.msra.mxu0 0.0
  %152 = vmatprep.subr.mxu0 0.0
  %153 = vmatpush1.xpose.msra.mxu0 0.0
  %154 = vmatprep.subr.mxu0 0.0
  %155 = vmatpush1.xpose.msra.mxu0 0.0
  %156 = vmatprep.subr.mxu0 0.0
  %157 = vmatpush1.xpose.msra.mxu0 0.0
  %158 = vmatprep.subr.mxu0 0.0
  %159 = vmatpush1.xpose.msra.mxu0 0.0
  %160 = vmatprep.subr.mxu0 0.0
  %161 = vmatpush1.xpose.msra.mxu0 0.0
  %162 = vmatprep.subr.mxu0 0.0
  %163 = vmatpush1.xpose.msra.mxu0 0.0
  %164 = vmatprep.subr.mxu0 0.0
  %165 = vmatpush1.xpose.msra.mxu0 0.0
  %166 = vmatprep.subr.mxu0 0.0
  %167 = vmatpush1.xpose.msra.mxu0 0.0
  %168 = vmatprep.subr.mxu0 0.0
  %169 = vmatpush1.xpose.msra.mxu0 0.0
  %170 = vmatprep.subr.mxu0 0.0
  %171 = vmatpush1.xpose.msra.mxu0 0.0
  %172 = vmatprep.subr.mxu0 0.0
  %173 = vmatpush1.xpose.msra.mxu0 0.0
  %174 = vmatprep.subr.mxu0 0.0
  %175 = vmatpush1.xpose.msra.mxu0 0.0
  %176 = vmatprep.subr.mxu0 0.0
  %177 = vmatpush1.xpose.msra.mxu0 0.0
  %178 = vmatprep.subr.mxu0 0.0
  %179 = vmatpush1.xpose.msra.mxu0 0.0
  %180 = vmatprep.subr.mxu0 0.0
  %181 = vmatpush1.xpose.msra.mxu0 0.0
  %182 = vmatprep.subr.mxu0 0.0
  %183 = vmatpush1.xpose.msra.mxu0 0.0
  %184 = vmatprep.subr.mxu0 0.0
  %185 = vmatpush1.xpose.msra.mxu0 0.0
  %186 = vmatprep.subr.mxu0 0.0
  %187 = vmatpush1.xpose.msra.mxu0 0.0
  %188 = vmatprep.subr.mxu0 0.0
  %189 = vmatpush1.xpose.msra.mxu0 0.0
  %190 = vmatprep.subr.mxu0 0.0
  %191 = vmatpush1.xpose.msra.mxu0 0.0
  %192 = vmatprep.subr.mxu0 0.0
  %193 = vmatpush1.xpose.msra.mxu0 0.0
  %194 = vmatprep.subr.mxu0 0.0
  %195 = vmatpush1.xpose.msra.mxu0 0.0
  %196 = vmatprep.mubr.f32.mxu0 0.0
  %197 = vmatmul.mubr.f32.gmra.mrb[0].mxu0 %v55
  %v198 = vpop.f32.mrb[0].mxu0
  %v199 = vadd.f32 %v51, %v198
  %v200 = vpop.f32.mrb[0].mxu0
  %201 = vmatprep.mubr.f32.mxu0 0.0
  %202 = vmatmul.mubr.f32.gmra.mrb[0].mxu0 %v58
  %v203 = vpop.f32.mrb[0].mxu0
  %v204 = vadd.f32 %v51, %v203
  %v205 = vpop.f32.mrb[0].mxu0
  %206 = vmatprep.mubr.f32.mxu0 0.0
  %207 = vmatmul.mubr.f32.gmra.mrb[0].mxu0 %v61
  %v208 = vpop.f32.mrb[0].mxu0
  %v209 = vadd.f32 %v51, %v208
  %v210 = vpop.f32.mrb[0].mxu0
  %211 = vmatprep.mubr.f32.mxu0 0.0
  %212 = vmatmul.mubr.f32.gmra.mrb[0].mxu0 %v64
  %v213 = vpop.f32.mrb[0].mxu0
  %v214 = vadd.f32 %v51, %v213
  %v215 = vpop.f32.mrb[0].mxu0
  %216 = vmatprep.mubr.f32.mxu0 0.0
  %217 = vmatmul.mubr.f32.gmra.mrb[0].mxu0 %v67
  %v218 = vpop.f32.mrb[0].mxu0
  %v219 = vadd.f32 %v51, %v218
  %v220 = vpop.f32.mrb[0].mxu0
  %221 = vmatprep.mubr.f32.mxu0 0.0
  %222 = vmatmul.mubr.f32.gmra.mrb[0].mxu0 %v70
  %v223 = vpop.f32.mrb[0].mxu0
  %v224 = vadd.f32 %v51, %v223
  %v225 = vpop.f32.mrb[0].mxu0
  %226 = vmatprep.mubr.f32.mxu0 0.0
  %227 = vmatmul.mubr.f32.gmra.mrb[0].mxu0 %v73
  %v228 = vpop.f32.mrb[0].mxu0
  %v229 = vadd.f32 %v51, %v228
  %v230 = vpop.f32.mrb[0].mxu0
  %231 = vmatprep.mubr.f32.mxu0 0.0
  %232 = vmatmul.mubr.f32.gmra.mrb[0].mxu0 %v76
  %v233 = vpop.f32.mrb[0].mxu0
  %v234 = vadd.f32 %v51, %v233
  %v235 = vpop.f32.mrb[0].mxu0
  %236 = vmatprep.mubr.f32.mxu0 0.0
  %237 = vmatmul.mubr.f32.gmra.mrb[0].mxu0 %v79
  %v238 = vpop.f32.mrb[0].mxu0
  %v239 = vadd.f32 %v51, %v238
  %v240 = vpop.f32.mrb[0].mxu0
  %241 = vmatprep.mubr.f32.mxu0 0.0
  %242 = vmatmul.mubr.f32.gmra.mrb[0].mxu0 %v82
  %v243 = vpop.f32.mrb[0].mxu0
  %v244 = vadd.f32 %v51, %v243
  %v245 = vpop.f32.mrb[0].mxu0
  %246 = vmatprep.mubr.f32.mxu0 0.0
  %247 = vmatmul.mubr.f32.gmra.mrb[0].mxu0 %v85
  %v248 = vpop.f32.mrb[0].mxu0
  %v249 = vadd.f32 %v51, %v248
  %v250 = vpop.f32.mrb[0].mxu0
  %251 = vmatprep.mubr.f32.mxu0 0.0
  %252 = vmatmul.mubr.f32.gmra.mrb[0].mxu0 %v88
  %v253 = vpop.f32.mrb[0].mxu0
  %v254 = vadd.f32 %v51, %v253
  %v255 = vpop.f32.mrb[0].mxu0
  %256 = vmatprep.mubr.f32.mxu0 0.0
  %257 = vmatmul.mubr.f32.gmra.mrb[0].mxu0 %v91
  %v258 = vpop.f32.mrb[0].mxu0
  %v259 = vadd.f32 %v51, %v258
  %v260 = vpop.f32.mrb[0].mxu0
  %261 = vmatprep.mubr.f32.mxu0 0.0
  %262 = vmatmul.mubr.f32.gmra.mrb[0].mxu0 %v94
  %v263 = vpop.f32.mrb[0].mxu0
  %v264 = vadd.f32 %v51, %v263
  %v265 = vpop.f32.mrb[0].mxu0
  %266 = vmatprep.mubr.f32.mxu0 0.0
  %267 = vmatmul.mubr.f32.gmra.mrb[0].mxu0 %v97
  %v268 = vpop.f32.mrb[0].mxu0
  %v269 = vadd.f32 %v51, %v268
  %v270 = vpop.f32.mrb[0].mxu0
  %271 = vmatprep.mubr.f32.mxu0 0.0
  %272 = vmatmul.mubr.f32.gmra.mrb[0].mxu0 %v100
  %v273 = vpop.f32.mrb[0].mxu0
  %v274 = vadd.f32 %v51, %v273
  %v275 = vpop.f32.mrb[0].mxu0
  %276 = vmatprep.mubr.f32.mxu0 0.0
  %277 = vmatmul.mubr.f32.gmra.mrb[0].mxu0 %v103
  %v278 = vpop.f32.mrb[0].mxu0
  %v279 = vadd.f32 %v51, %v278
  %v280 = vpop.f32.mrb[0].mxu0
  %281 = vmatprep.mubr.f32.mxu0 0.0
  %282 = vmatmul.mubr.f32.gmra.mrb[0].mxu0 %v106
  %v283 = vpop.f32.mrb[0].mxu0
  %v284 = vadd.f32 %v51, %v283
  %v285 = vpop.f32.mrb[0].mxu0
  %286 = vmatprep.mubr.f32.mxu0 0.0
  %287 = vmatmul.mubr.f32.gmra.mrb[0].mxu0 %v109
  %v288 = vpop.f32.mrb[0].mxu0
  %v289 = vadd.f32 %v51, %v288
  %v290 = vpop.f32.mrb[0].mxu0
  %291 = vmatprep.mubr.f32.mxu0 0.0
  %292 = vmatmul.mubr.f32.gmra.mrb[0].mxu0 %v112
  %v293 = vpop.f32.mrb[0].mxu0
  %v294 = vadd.f32 %v51, %v293
  %v295 = vpop.f32.mrb[0].mxu0
  %296 = vmatprep.mubr.f32.mxu0 0.0
  %297 = vmatmul.mubr.f32.gmra.mrb[0].mxu0 %v115
  %v298 = vpop.f32.mrb[0].mxu0
  %v299 = vadd.f32 %v51, %v298
  %v300 = vpop.f32.mrb[0].mxu0
  %301 = vmatprep.mubr.f32.mxu0 0.0
  %302 = vmatmul.mubr.f32.gmra.mrb[0].mxu0 %v118
  %v303 = vpop.f32.mrb[0].mxu0
  %v304 = vadd.f32 %v51, %v303
  %v305 = vpop.f32.mrb[0].mxu0
  %306 = vmatprep.mubr.f32.mxu0 0.0
  %307 = vmatmul.mubr.f32.gmra.mrb[0].mxu0 %v121
  %v308 = vpop.f32.mrb[0].mxu0
  %v309 = vadd.f32 %v51, %v308
  %v310 = vpop.f32.mrb[0].mxu0
  %311 = vmatprep.mubr.f32.mxu0 0.0
  %312 = vmatmul.mubr.f32.gmra.mrb[0].mxu0 %v124
  %v313 = vpop.f32.mrb[0].mxu0
  %v314 = vadd.f32 %v51, %v313
  %v315 = vpop.f32.mrb[0].mxu0
  %316 = vmatprep.mubr.f32.mxu0 0.0
  %317 = vmatmul.mubr.f32.gmra.mrb[0].mxu0 %v127
  %v318 = vpop.f32.mrb[0].mxu0
  %v319 = vadd.f32 %v51, %v318
  %v320 = vpop.f32.mrb[0].mxu0
  %321 = vdwg.mxu0
  %vm322 = vcmask 64512
  %v323 = vsel %vm322, %v199, -inf
  %324 = vmax.xlane.f32.xlu0 %v323
  %v325 = vpop.xlane.xlu0 %324
  %v326 = vsel %vm322, %v204, -inf
  %327 = vmax.xlane.f32.xlu0 %v326
  %v328 = vpop.xlane.xlu0 %327
  %v329 = vsel %vm322, %v209, -inf
  %330 = vmax.xlane.f32.xlu0 %v329
  %v331 = vpop.xlane.xlu0 %330
  %v332 = vsel %vm322, %v214, -inf
  %333 = vmax.xlane.f32.xlu0 %v332
  %v334 = vpop.xlane.xlu0 %333
  %v335 = vsel %vm322, %v219, -inf
  %336 = vmax.xlane.f32.xlu0 %v335
  %v337 = vpop.xlane.xlu0 %336
  %v338 = vsel %vm322, %v224, -inf
  %339 = vmax.xlane.f32.xlu0 %v338
  %v340 = vpop.xlane.xlu0 %339
  %v341 = vsel %vm322, %v229, -inf
  %342 = vmax.xlane.f32.xlu0 %v341
  %v343 = vpop.xlane.xlu0 %342
  %v344 = vsel %vm322, %v234, -inf
  %345 = vmax.xlane.f32.xlu0 %v344
  %v346 = vpop.xlane.xlu0 %345
  %v347 = vsel %vm322, %v239, -inf
  %348 = vmax.xlane.f32.xlu0 %v347
  %v349 = vpop.xlane.xlu0 %348
  %v350 = vsel %vm322, %v244, -inf
  %351 = vmax.xlane.f32.xlu0 %v350
  %v352 = vpop.xlane.xlu0 %351
  %v353 = vsel %vm322, %v249, -inf
  %354 = vmax.xlane.f32.xlu0 %v353
  %v355 = vpop.xlane.xlu0 %354
  %v356 = vsel %vm322, %v254, -inf
  %357 = vmax.xlane.f32.xlu0 %v356
  %v358 = vpop.xlane.xlu0 %357
  %v359 = vsel %vm322, %v259, -inf
  %360 = vmax.xlane.f32.xlu0 %v359
  %v361 = vpop.xlane.xlu0 %360
  %v362 = vsel %vm322, %v264, -inf
  %363 = vmax.xlane.f32.xlu0 %v362
  %v364 = vpop.xlane.xlu0 %363
  %v365 = vsel %vm322, %v269, -inf
  %366 = vmax.xlane.f32.xlu0 %v365
  %v367 = vpop.xlane.xlu0 %366
  %v368 = vsel %vm322, %v274, -inf
  %369 = vmax.xlane.f32.xlu0 %v368
  %v370 = vpop.xlane.xlu0 %369
  %v371 = vsel %vm322, %v279, -inf
  %372 = vmax.xlane.f32.xlu0 %v371
  %v373 = vpop.xlane.xlu0 %372
  %v374 = vsel %vm322, %v284, -inf
  %375 = vmax.xlane.f32.xlu0 %v374
  %v376 = vpop.xlane.xlu0 %375
  %v377 = vsel %vm322, %v289, -inf
  %378 = vmax.xlane.f32.xlu0 %v377
  %v379 = vpop.xlane.xlu0 %378
  %v380 = vsel %vm322, %v294, -inf
  %381 = vmax.xlane.f32.xlu0 %v380
  %v382 = vpop.xlane.xlu0 %381
  %v383 = vsel %vm322, %v299, -inf
  %384 = vmax.xlane.f32.xlu0 %v383
  %v385 = vpop.xlane.xlu0 %384
  %v386 = vsel %vm322, %v304, -inf
  %387 = vmax.xlane.f32.xlu0 %v386
  %v388 = vpop.xlane.xlu0 %387
  %v389 = vsel %vm322, %v309, -inf
  %390 = vmax.xlane.f32.xlu0 %v389
  %v391 = vpop.xlane.xlu0 %390
  %v392 = vsel %vm322, %v314, -inf
  %393 = vmax.xlane.f32.xlu0 %v392
  %v394 = vpop.xlane.xlu0 %393
  %v395 = vsel %vm322, %v319, -inf
  %396 = vmax.xlane.f32.xlu0 %v395
  %v397 = vpop.xlane.xlu0 %396
  %v398 = vsub.f32 %v199, %v325
  %v399 = vsub.f32 %v204, %v328
  %v400 = vsub.f32 %v209, %v331
  %v401 = vsub.f32 %v214, %v334
  %v402 = vsub.f32 %v219, %v337
  %v403 = vsub.f32 %v224, %v340
  %v404 = vsub.f32 %v229, %v343
  %v405 = vsub.f32 %v234, %v346
  %v406 = vsub.f32 %v239, %v349
  %v407 = vsub.f32 %v244, %v352
  %v408 = vsub.f32 %v249, %v355
  %v409 = vsub.f32 %v254, %v358
  %v410 = vsub.f32 %v259, %v361
  %v411 = vsub.f32 %v264, %v364
  %v412 = vsub.f32 %v269, %v367
  %v413 = vsub.f32 %v274, %v370
  %v414 = vsub.f32 %v279, %v373
  %v415 = vsub.f32 %v284, %v376
  %v416 = vsub.f32 %v289, %v379
  %v417 = vsub.f32 %v294, %v382
  %v418 = vsub.f32 %v299, %v385
  %v419 = vsub.f32 %v304, %v388
  %v420 = vsub.f32 %v309, %v391
  %v421 = vsub.f32 %v314, %v394
  %v422 = vsub.f32 %v319, %v397
  %v423 = vmul.f32 %v398, 1.442695
  %v424 = vpow.pop %v423
  %v425 = vmul.f32 %v399, 1.442695
  %v426 = vpow.pop %v425
  %v427 = vmul.f32 %v400, 1.442695
  %v428 = vpow.pop %v427
  %v429 = vmul.f32 %v401, 1.442695
  %v430 = vpow.pop %v429
  %v431 = vmul.f32 %v402, 1.442695
  %v432 = vpow.pop %v431
  %v433 = vmul.f32 %v403, 1.442695
  %v434 = vpow.pop %v433
  %v435 = vmul.f32 %v404, 1.442695
  %v436 = vpow.pop %v435
  %v437 = vmul.f32 %v405, 1.442695
  %v438 = vpow.pop %v437
  %v439 = vmul.f32 %v406, 1.442695
  %v440 = vpow.pop %v439
  %v441 = vmul.f32 %v407, 1.442695
  %v442 = vpow.pop %v441
  %v443 = vmul.f32 %v408, 1.442695
  %v444 = vpow.pop %v443
  %v445 = vmul.f32 %v409, 1.442695
  %v446 = vpow.pop %v445
  %v447 = vmul.f32 %v410, 1.442695
  %v448 = vpow.pop %v447
  %v449 = vmul.f32 %v411, 1.442695
  %v450 = vpow.pop %v449
  %v451 = vmul.f32 %v412, 1.442695
  %v452 = vpow.pop %v451
  %v453 = vmul.f32 %v413, 1.442695
  %v454 = vpow.pop %v453
  %v455 = vmul.f32 %v414, 1.442695
  %v456 = vpow.pop %v455
  %v457 = vmul.f32 %v415, 1.442695
  %v458 = vpow.pop %v457
  %v459 = vmul.f32 %v416, 1.442695
  %v460 = vpow.pop %v459
  %v461 = vmul.f32 %v417, 1.442695
  %v462 = vpow.pop %v461
  %v463 = vmul.f32 %v418, 1.442695
  %v464 = vpow.pop %v463
  %v465 = vmul.f32 %v419, 1.442695
  %v466 = vpow.pop %v465
  %v467 = vmul.f32 %v420, 1.442695
  %v468 = vpow.pop %v467
  %v469 = vmul.f32 %v421, 1.442695
  %v470 = vpow.pop %v469
  %v471 = vmul.f32 %v422, 1.442695
  %v472 = vpow.pop %v471
  %v473 = vsel %vm322, %v424, 0.0
  %474 = vadd.xlane.f32.xlu0 %v473
  %v475 = vpop.xlane.xlu0 %474
  %v476 = vsel %vm322, %v426, 0.0
  %477 = vadd.xlane.f32.xlu0 %v476
  %v478 = vpop.xlane.xlu0 %477
  %v479 = vsel %vm322, %v428, 0.0
  %480 = vadd.xlane.f32.xlu0 %v479
  %v481 = vpop.xlane.xlu0 %480
  %v482 = vsel %vm322, %v430, 0.0
  %483 = vadd.xlane.f32.xlu0 %v482
  %v484 = vpop.xlane.xlu0 %483
  %v485 = vsel %vm322, %v432, 0.0
  %486 = vadd.xlane.f32.xlu0 %v485
  %v487 = vpop.xlane.xlu0 %486
  %v488 = vsel %vm322, %v434, 0.0
  %489 = vadd.xlane.f32.xlu0 %v488
  %v490 = vpop.xlane.xlu0 %489
  %v491 = vsel %vm322, %v436, 0.0
  %492 = vadd.xlane.f32.xlu0 %v491
  %v493 = vpop.xlane.xlu0 %492
  %v494 = vsel %vm322, %v438, 0.0
  %495 = vadd.xlane.f32.xlu0 %v494
  %v496 = vpop.xlane.xlu0 %495
  %v497 = vsel %vm322, %v440, 0.0
  %498 = vadd.xlane.f32.xlu0 %v497
  %v499 = vpop.xlane.xlu0 %498
  %v500 = vsel %vm322, %v442, 0.0
  %501 = vadd.xlane.f32.xlu0 %v500
  %v502 = vpop.xlane.xlu0 %501
  %v503 = vsel %vm322, %v444, 0.0
  %504 = vadd.xlane.f32.xlu0 %v503
  %v505 = vpop.xlane.xlu0 %504
  %v506 = vsel %vm322, %v446, 0.0
  %507 = vadd.xlane.f32.xlu0 %v506
  %v508 = vpop.xlane.xlu0 %507
  %v509 = vsel %vm322, %v448, 0.0
  %510 = vadd.xlane.f32.xlu0 %v509
  %v511 = vpop.xlane.xlu0 %510
  %v512 = vsel %vm322, %v450, 0.0
  %513 = vadd.xlane.f32.xlu0 %v512
  %v514 = vpop.xlane.xlu0 %513
  %v515 = vsel %vm322, %v452, 0.0
  %516 = vadd.xlane.f32.xlu0 %v515
  %v517 = vpop.xlane.xlu0 %516
  %v518 = vsel %vm322, %v454, 0.0
  %519 = vadd.xlane.f32.xlu0 %v518
  %v520 = vpop.xlane.xlu0 %519
  %v521 = vsel %vm322, %v456, 0.0
  %522 = vadd.xlane.f32.xlu0 %v521
  %v523 = vpop.xlane.xlu0 %522
  %v524 = vsel %vm322, %v458, 0.0
  %525 = vadd.xlane.f32.xlu0 %v524
  %v526 = vpop.xlane.xlu0 %525
  %v527 = vsel %vm322, %v460, 0.0
  %528 = vadd.xlane.f32.xlu0 %v527
  %v529 = vpop.xlane.xlu0 %528
  %v530 = vsel %vm322, %v462, 0.0
  %531 = vadd.xlane.f32.xlu0 %v530
  %v532 = vpop.xlane.xlu0 %531
  %v533 = vsel %vm322, %v464, 0.0
  %534 = vadd.xlane.f32.xlu0 %v533
  %v535 = vpop.xlane.xlu0 %534
  %v536 = vsel %vm322, %v466, 0.0
  %537 = vadd.xlane.f32.xlu0 %v536
  %v538 = vpop.xlane.xlu0 %537
  %v539 = vsel %vm322, %v468, 0.0
  %540 = vadd.xlane.f32.xlu0 %v539
  %v541 = vpop.xlane.xlu0 %540
  %v542 = vsel %vm322, %v470, 0.0
  %543 = vadd.xlane.f32.xlu0 %v542
  %v544 = vpop.xlane.xlu0 %543
  %v545 = vsel %vm322, %v472, 0.0
  %546 = vadd.xlane.f32.xlu0 %v545
  %v547 = vpop.xlane.xlu0 %546
  %v548 = vrcp.pop %v475
  %v549 = vrcp.pop %v478
  %v550 = vrcp.pop %v481
  %v551 = vrcp.pop %v484
  %v552 = vrcp.pop %v487
  %v553 = vrcp.pop %v490
  %v554 = vrcp.pop %v493
  %v555 = vrcp.pop %v496
  %v556 = vrcp.pop %v499
  %v557 = vrcp.pop %v502
  %v558 = vrcp.pop %v505
  %v559 = vrcp.pop %v508
  %v560 = vrcp.pop %v511
  %v561 = vrcp.pop %v514
  %v562 = vrcp.pop %v517
  %v563 = vrcp.pop %v520
  %v564 = vrcp.pop %v523
  %v565 = vrcp.pop %v526
  %v566 = vrcp.pop %v529
  %v567 = vrcp.pop %v532
  %v568 = vrcp.pop %v535
  %v569 = vrcp.pop %v538
  %v570 = vrcp.pop %v541
  %v571 = vrcp.pop %v544
  %v572 = vrcp.pop %v547
  %v573 = vmul.f32 %v475, %v548
  %v574 = vmul.f32 %v478, %v549
  %v575 = vmul.f32 %v481, %v550
  %v576 = vmul.f32 %v484, %v551
  %v577 = vmul.f32 %v487, %v552
  %v578 = vmul.f32 %v490, %v553
  %v579 = vmul.f32 %v493, %v554
  %v580 = vmul.f32 %v496, %v555
  %v581 = vmul.f32 %v499, %v556
  %v582 = vmul.f32 %v502, %v557
  %v583 = vmul.f32 %v505, %v558
  %v584 = vmul.f32 %v508, %v559
  %v585 = vmul.f32 %v511, %v560
  %v586 = vmul.f32 %v514, %v561
  %v587 = vmul.f32 %v517, %v562
  %v588 = vmul.f32 %v520, %v563
  %v589 = vmul.f32 %v523, %v564
  %v590 = vmul.f32 %v526, %v565
  %v591 = vmul.f32 %v529, %v566
  %v592 = vmul.f32 %v532, %v567
  %v593 = vmul.f32 %v535, %v568
  %v594 = vmul.f32 %v538, %v569
  %v595 = vmul.f32 %v541, %v570
  %v596 = vmul.f32 %v544, %v571
  %v597 = vmul.f32 %v547, %v572
  %v598 = vsub.f32 2.0, %v573
  %v599 = vsub.f32 2.0, %v574
  %v600 = vsub.f32 2.0, %v575
  %v601 = vsub.f32 2.0, %v576
  %v602 = vsub.f32 2.0, %v577
  %v603 = vsub.f32 2.0, %v578
  %v604 = vsub.f32 2.0, %v579
  %v605 = vsub.f32 2.0, %v580
  %v606 = vsub.f32 2.0, %v581
  %v607 = vsub.f32 2.0, %v582
  %v608 = vsub.f32 2.0, %v583
  %v609 = vsub.f32 2.0, %v584
  %v610 = vsub.f32 2.0, %v585
  %v611 = vsub.f32 2.0, %v586
  %v612 = vsub.f32 2.0, %v587
  %v613 = vsub.f32 2.0, %v588
  %v614 = vsub.f32 2.0, %v589
  %v615 = vsub.f32 2.0, %v590
  %v616 = vsub.f32 2.0, %v591
  %v617 = vsub.f32 2.0, %v592
  %v618 = vsub.f32 2.0, %v593
  %v619 = vsub.f32 2.0, %v594
  %v620 = vsub.f32 2.0, %v595
  %v621 = vsub.f32 2.0, %v596
  %v622 = vsub.f32 2.0, %v597
  %v623 = vmul.f32 %v548, %v598
  %v624 = vmul.f32 %v549, %v599
  %v625 = vmul.f32 %v550, %v600
  %v626 = vmul.f32 %v551, %v601
  %v627 = vmul.f32 %v552, %v602
  %v628 = vmul.f32 %v553, %v603
  %v629 = vmul.f32 %v554, %v604
  %v630 = vmul.f32 %v555, %v605
  %v631 = vmul.f32 %v556, %v606
  %v632 = vmul.f32 %v557, %v607
  %v633 = vmul.f32 %v558, %v608
  %v634 = vmul.f32 %v559, %v609
  %v635 = vmul.f32 %v560, %v610
  %v636 = vmul.f32 %v561, %v611
  %v637 = vmul.f32 %v562, %v612
  %v638 = vmul.f32 %v563, %v613
  %v639 = vmul.f32 %v564, %v614
  %v640 = vmul.f32 %v565, %v615
  %v641 = vmul.f32 %v566, %v616
  %v642 = vmul.f32 %v567, %v617
  %v643 = vmul.f32 %v568, %v618
  %v644 = vmul.f32 %v569, %v619
  %v645 = vmul.f32 %v570, %v620
  %v646 = vmul.f32 %v571, %v621
  %v647 = vmul.f32 %v572, %v622
  %v648 = vmul.f32 %v424, %v623
  %v649 = vmul.f32 %v426, %v624
  %v650 = vmul.f32 %v428, %v625
  %v651 = vmul.f32 %v430, %v626
  %v652 = vmul.f32 %v432, %v627
  %v653 = vmul.f32 %v434, %v628
  %v654 = vmul.f32 %v436, %v629
  %v655 = vmul.f32 %v438, %v630
  %v656 = vmul.f32 %v440, %v631
  %v657 = vmul.f32 %v442, %v632
  %v658 = vmul.f32 %v444, %v633
  %v659 = vmul.f32 %v446, %v634
  %v660 = vmul.f32 %v448, %v635
  %v661 = vmul.f32 %v450, %v636
  %v662 = vmul.f32 %v452, %v637
  %v663 = vmul.f32 %v454, %v638
  %v664 = vmul.f32 %v456, %v639
  %v665 = vmul.f32 %v458, %v640
  %v666 = vmul.f32 %v460, %v641
  %v667 = vmul.f32 %v462, %v642
  %v668 = vmul.f32 %v464, %v643
  %v669 = vmul.f32 %v466, %v644
  %v670 = vmul.f32 %v468, %v645
  %v671 = vmul.f32 %v470, %v646
  %v672 = vmul.f32 %v472, %v647
  %674 = vset.pattern.permute.xlu0 0
  %675 = vperm.xlu0 %674, %v648
  %v676 = vpop.permute.xlu0 %675
  %679 = vset.pattern.permute.xlu0 0
  %680 = vperm.xlu0 %679, %v649
  %v681 = vpop.permute.xlu0 %680
  %684 = vset.pattern.permute.xlu0 0
  %685 = vperm.xlu0 %684, %v650
  %v686 = vpop.permute.xlu0 %685
  %689 = vset.pattern.permute.xlu0 0
  %690 = vperm.xlu0 %689, %v651
  %v691 = vpop.permute.xlu0 %690
  %694 = vset.pattern.permute.xlu0 0
  %695 = vperm.xlu0 %694, %v652
  %v696 = vpop.permute.xlu0 %695
  %699 = vset.pattern.permute.xlu0 0
  %700 = vperm.xlu0 %699, %v653
  %v701 = vpop.permute.xlu0 %700
  %704 = vset.pattern.permute.xlu0 0
  %705 = vperm.xlu0 %704, %v654
  %v706 = vpop.permute.xlu0 %705
  %709 = vset.pattern.permute.xlu0 0
  %710 = vperm.xlu0 %709, %v655
  %v711 = vpop.permute.xlu0 %710
  %714 = vset.pattern.permute.xlu0 0
  %715 = vperm.xlu0 %714, %v656
  %v716 = vpop.permute.xlu0 %715
  %719 = vset.pattern.permute.xlu0 0
  %720 = vperm.xlu0 %719, %v657
  %v721 = vpop.permute.xlu0 %720
  %724 = vset.pattern.permute.xlu0 0
  %725 = vperm.xlu0 %724, %v658
  %v726 = vpop.permute.xlu0 %725
  %729 = vset.pattern.permute.xlu0 0
  %730 = vperm.xlu0 %729, %v659
  %v731 = vpop.permute.xlu0 %730
  %734 = vset.pattern.permute.xlu0 0
  %735 = vperm.xlu0 %734, %v660
  %v736 = vpop.permute.xlu0 %735
  %739 = vset.pattern.permute.xlu0 0
  %740 = vperm.xlu0 %739, %v661
  %v741 = vpop.permute.xlu0 %740
  %744 = vset.pattern.permute.xlu0 0
  %745 = vperm.xlu0 %744, %v662
  %v746 = vpop.permute.xlu0 %745
  %749 = vset.pattern.permute.xlu0 0
  %750 = vperm.xlu0 %749, %v663
  %v751 = vpop.permute.xlu0 %750
  %754 = vset.pattern.permute.xlu0 0
  %755 = vperm.xlu0 %754, %v664
  %v756 = vpop.permute.xlu0 %755
  %759 = vset.pattern.permute.xlu0 0
  %760 = vperm.xlu0 %759, %v665
  %v761 = vpop.permute.xlu0 %760
  %764 = vset.pattern.permute.xlu0 0
  %765 = vperm.xlu0 %764, %v666
  %v766 = vpop.permute.xlu0 %765
  %769 = vset.pattern.permute.xlu0 0
  %770 = vperm.xlu0 %769, %v667
  %v771 = vpop.permute.xlu0 %770
  %774 = vset.pattern.permute.xlu0 0
  %775 = vperm.xlu0 %774, %v668
  %v776 = vpop.permute.xlu0 %775
  %779 = vset.pattern.permute.xlu0 0
  %780 = vperm.xlu0 %779, %v669
  %v781 = vpop.permute.xlu0 %780
  %784 = vset.pattern.permute.xlu0 0
  %785 = vperm.xlu0 %784, %v670
  %v786 = vpop.permute.xlu0 %785
  %789 = vset.pattern.permute.xlu0 0
  %790 = vperm.xlu0 %789, %v671
  %v791 = vpop.permute.xlu0 %790
  %794 = vset.pattern.permute.xlu0 0
  %795 = vperm.xlu0 %794, %v672
  %v796 = vpop.permute.xlu0 %795
  %v798 = vlaneseq
  %v799 = vshrl.u32 %v798, 7
  %v800 = vsub.s32 0, %v799
  %v801 = vrot.slane %v46, %v800
  %v802 = vmul.f32 %v676, %v801
  %v803 = vmul.f32 %v681, %v801
  %v804 = vmul.f32 %v686, %v801
  %v805 = vmul.f32 %v691, %v801
  %v806 = vmul.f32 %v696, %v801
  %v807 = vmul.f32 %v701, %v801
  %v808 = vmul.f32 %v706, %v801
  %v809 = vmul.f32 %v711, %v801
  %v810 = vmul.f32 %v716, %v801
  %v811 = vmul.f32 %v721, %v801
  %v812 = vmul.f32 %v726, %v801
  %v813 = vmul.f32 %v731, %v801
  %v814 = vmul.f32 %v736, %v801
  %v815 = vmul.f32 %v741, %v801
  %v816 = vmul.f32 %v746, %v801
  %v817 = vmul.f32 %v751, %v801
  %v818 = vmul.f32 %v756, %v801
  %v819 = vmul.f32 %v761, %v801
  %v820 = vmul.f32 %v766, %v801
  %v821 = vmul.f32 %v771, %v801
  %v822 = vmul.f32 %v776, %v801
  %v823 = vmul.f32 %v781, %v801
  %v824 = vmul.f32 %v786, %v801
  %v825 = vmul.f32 %v791, %v801
  %v826 = vmul.f32 %v796, %v801
  %827 = vset.pattern.permute.xlu0 1
  %828 = vperm.xlu0 %827, %v648
  %v829 = vpop.permute.xlu0 %828
  %831 = vset.pattern.permute.xlu0 1
  %832 = vperm.xlu0 %831, %v649
  %v833 = vpop.permute.xlu0 %832
  %835 = vset.pattern.permute.xlu0 1
  %836 = vperm.xlu0 %835, %v650
  %v837 = vpop.permute.xlu0 %836
  %839 = vset.pattern.permute.xlu0 1
  %840 = vperm.xlu0 %839, %v651
  %v841 = vpop.permute.xlu0 %840
  %843 = vset.pattern.permute.xlu0 1
  %844 = vperm.xlu0 %843, %v652
  %v845 = vpop.permute.xlu0 %844
  %847 = vset.pattern.permute.xlu0 1
  %848 = vperm.xlu0 %847, %v653
  %v849 = vpop.permute.xlu0 %848
  %851 = vset.pattern.permute.xlu0 1
  %852 = vperm.xlu0 %851, %v654
  %v853 = vpop.permute.xlu0 %852
  %855 = vset.pattern.permute.xlu0 1
  %856 = vperm.xlu0 %855, %v655
  %v857 = vpop.permute.xlu0 %856
  %859 = vset.pattern.permute.xlu0 1
  %860 = vperm.xlu0 %859, %v656
  %v861 = vpop.permute.xlu0 %860
  %863 = vset.pattern.permute.xlu0 1
  %864 = vperm.xlu0 %863, %v657
  %v865 = vpop.permute.xlu0 %864
  %867 = vset.pattern.permute.xlu0 1
  %868 = vperm.xlu0 %867, %v658
  %v869 = vpop.permute.xlu0 %868
  %871 = vset.pattern.permute.xlu0 1
  %872 = vperm.xlu0 %871, %v659
  %v873 = vpop.permute.xlu0 %872
  %875 = vset.pattern.permute.xlu0 1
  %876 = vperm.xlu0 %875, %v660
  %v877 = vpop.permute.xlu0 %876
  %879 = vset.pattern.permute.xlu0 1
  %880 = vperm.xlu0 %879, %v661
  %v881 = vpop.permute.xlu0 %880
  %883 = vset.pattern.permute.xlu0 1
  %884 = vperm.xlu0 %883, %v662
  %v885 = vpop.permute.xlu0 %884
  %887 = vset.pattern.permute.xlu0 1
  %888 = vperm.xlu0 %887, %v663
  %v889 = vpop.permute.xlu0 %888
  %891 = vset.pattern.permute.xlu0 1
  %892 = vperm.xlu0 %891, %v664
  %v893 = vpop.permute.xlu0 %892
  %895 = vset.pattern.permute.xlu0 1
  %896 = vperm.xlu0 %895, %v665
  %v897 = vpop.permute.xlu0 %896
  %899 = vset.pattern.permute.xlu0 1
  %900 = vperm.xlu0 %899, %v666
  %v901 = vpop.permute.xlu0 %900
  %903 = vset.pattern.permute.xlu0 1
  %904 = vperm.xlu0 %903, %v667
  %v905 = vpop.permute.xlu0 %904
  %907 = vset.pattern.permute.xlu0 1
  %908 = vperm.xlu0 %907, %v668
  %v909 = vpop.permute.xlu0 %908
  %911 = vset.pattern.permute.xlu0 1
  %912 = vperm.xlu0 %911, %v669
  %v913 = vpop.permute.xlu0 %912
  %915 = vset.pattern.permute.xlu0 1
  %916 = vperm.xlu0 %915, %v670
  %v917 = vpop.permute.xlu0 %916
  %919 = vset.pattern.permute.xlu0 1
  %920 = vperm.xlu0 %919, %v671
  %v921 = vpop.permute.xlu0 %920
  %923 = vset.pattern.permute.xlu0 1
  %924 = vperm.xlu0 %923, %v672
  %v925 = vpop.permute.xlu0 %924
  %v927 = vlaneseq
  %v928 = vshrl.u32 %v927, 7
  %v929 = vsub.s32 1, %v928
  %v930 = vrot.slane %v46, %v929
  %v931 = vmul.f32 %v829, %v930
  %v932 = vmul.f32 %v833, %v930
  %v933 = vmul.f32 %v837, %v930
  %v934 = vmul.f32 %v841, %v930
  %v935 = vmul.f32 %v845, %v930
  %v936 = vmul.f32 %v849, %v930
  %v937 = vmul.f32 %v853, %v930
  %v938 = vmul.f32 %v857, %v930
  %v939 = vmul.f32 %v861, %v930
  %v940 = vmul.f32 %v865, %v930
  %v941 = vmul.f32 %v869, %v930
  %v942 = vmul.f32 %v873, %v930
  %v943 = vmul.f32 %v877, %v930
  %v944 = vmul.f32 %v881, %v930
  %v945 = vmul.f32 %v885, %v930
  %v946 = vmul.f32 %v889, %v930
  %v947 = vmul.f32 %v893, %v930
  %v948 = vmul.f32 %v897, %v930
  %v949 = vmul.f32 %v901, %v930
  %v950 = vmul.f32 %v905, %v930
  %v951 = vmul.f32 %v909, %v930
  %v952 = vmul.f32 %v913, %v930
  %v953 = vmul.f32 %v917, %v930
  %v954 = vmul.f32 %v921, %v930
  %v955 = vmul.f32 %v925, %v930
  %v956 = vadd.f32 %v802, %v931
  %v957 = vadd.f32 %v803, %v932
  %v958 = vadd.f32 %v804, %v933
  %v959 = vadd.f32 %v805, %v934
  %v960 = vadd.f32 %v806, %v935
  %v961 = vadd.f32 %v807, %v936
  %v962 = vadd.f32 %v808, %v937
  %v963 = vadd.f32 %v809, %v938
  %v964 = vadd.f32 %v810, %v939
  %v965 = vadd.f32 %v811, %v940
  %v966 = vadd.f32 %v812, %v941
  %v967 = vadd.f32 %v813, %v942
  %v968 = vadd.f32 %v814, %v943
  %v969 = vadd.f32 %v815, %v944
  %v970 = vadd.f32 %v816, %v945
  %v971 = vadd.f32 %v817, %v946
  %v972 = vadd.f32 %v818, %v947
  %v973 = vadd.f32 %v819, %v948
  %v974 = vadd.f32 %v820, %v949
  %v975 = vadd.f32 %v821, %v950
  %v976 = vadd.f32 %v822, %v951
  %v977 = vadd.f32 %v823, %v952
  %v978 = vadd.f32 %v824, %v953
  %v979 = vadd.f32 %v825, %v954
  %v980 = vadd.f32 %v826, %v955
  %981 = vset.pattern.permute.xlu0 2
  %982 = vperm.xlu0 %981, %v648
  %v983 = vpop.permute.xlu0 %982
  %985 = vset.pattern.permute.xlu0 2
  %986 = vperm.xlu0 %985, %v649
  %v987 = vpop.permute.xlu0 %986
  %989 = vset.pattern.permute.xlu0 2
  %990 = vperm.xlu0 %989, %v650
  %v991 = vpop.permute.xlu0 %990
  %993 = vset.pattern.permute.xlu0 2
  %994 = vperm.xlu0 %993, %v651
  %v995 = vpop.permute.xlu0 %994
  %997 = vset.pattern.permute.xlu0 2
  %998 = vperm.xlu0 %997, %v652
  %v999 = vpop.permute.xlu0 %998
  %1001 = vset.pattern.permute.xlu0 2
  %1002 = vperm.xlu0 %1001, %v653
  %v1003 = vpop.permute.xlu0 %1002
  %1005 = vset.pattern.permute.xlu0 2
  %1006 = vperm.xlu0 %1005, %v654
  %v1007 = vpop.permute.xlu0 %1006
  %1009 = vset.pattern.permute.xlu0 2
  %1010 = vperm.xlu0 %1009, %v655
  %v1011 = vpop.permute.xlu0 %1010
  %1013 = vset.pattern.permute.xlu0 2
  %1014 = vperm.xlu0 %1013, %v656
  %v1015 = vpop.permute.xlu0 %1014
  %1017 = vset.pattern.permute.xlu0 2
  %1018 = vperm.xlu0 %1017, %v657
  %v1019 = vpop.permute.xlu0 %1018
  %1021 = vset.pattern.permute.xlu0 2
  %1022 = vperm.xlu0 %1021, %v658
  %v1023 = vpop.permute.xlu0 %1022
  %1025 = vset.pattern.permute.xlu0 2
  %1026 = vperm.xlu0 %1025, %v659
  %v1027 = vpop.permute.xlu0 %1026
  %1029 = vset.pattern.permute.xlu0 2
  %1030 = vperm.xlu0 %1029, %v660
  %v1031 = vpop.permute.xlu0 %1030
  %1033 = vset.pattern.permute.xlu0 2
  %1034 = vperm.xlu0 %1033, %v661
  %v1035 = vpop.permute.xlu0 %1034
  %1037 = vset.pattern.permute.xlu0 2
  %1038 = vperm.xlu0 %1037, %v662
  %v1039 = vpop.permute.xlu0 %1038
  %1041 = vset.pattern.permute.xlu0 2
  %1042 = vperm.xlu0 %1041, %v663
  %v1043 = vpop.permute.xlu0 %1042
  %1045 = vset.pattern.permute.xlu0 2
  %1046 = vperm.xlu0 %1045, %v664
  %v1047 = vpop.permute.xlu0 %1046
  %1049 = vset.pattern.permute.xlu0 2
  %1050 = vperm.xlu0 %1049, %v665
  %v1051 = vpop.permute.xlu0 %1050
  %1053 = vset.pattern.permute.xlu0 2
  %1054 = vperm.xlu0 %1053, %v666
  %v1055 = vpop.permute.xlu0 %1054
  %1057 = vset.pattern.permute.xlu0 2
  %1058 = vperm.xlu0 %1057, %v667
  %v1059 = vpop.permute.xlu0 %1058
  %1061 = vset.pattern.permute.xlu0 2
  %1062 = vperm.xlu0 %1061, %v668
  %v1063 = vpop.permute.xlu0 %1062
  %1065 = vset.pattern.permute.xlu0 2
  %1066 = vperm.xlu0 %1065, %v669
  %v1067 = vpop.permute.xlu0 %1066
  %1069 = vset.pattern.permute.xlu0 2
  %1070 = vperm.xlu0 %1069, %v670
  %v1071 = vpop.permute.xlu0 %1070
  %1073 = vset.pattern.permute.xlu0 2
  %1074 = vperm.xlu0 %1073, %v671
  %v1075 = vpop.permute.xlu0 %1074
  %1077 = vset.pattern.permute.xlu0 2
  %1078 = vperm.xlu0 %1077, %v672
  %v1079 = vpop.permute.xlu0 %1078
  %v1081 = vlaneseq
  %v1082 = vshrl.u32 %v1081, 7
  %v1083 = vsub.s32 2, %v1082
  %v1084 = vrot.slane %v46, %v1083
  %v1085 = vmul.f32 %v983, %v1084
  %v1086 = vmul.f32 %v987, %v1084
  %v1087 = vmul.f32 %v991, %v1084
  %v1088 = vmul.f32 %v995, %v1084
  %v1089 = vmul.f32 %v999, %v1084
  %v1090 = vmul.f32 %v1003, %v1084
  %v1091 = vmul.f32 %v1007, %v1084
  %v1092 = vmul.f32 %v1011, %v1084
  %v1093 = vmul.f32 %v1015, %v1084
  %v1094 = vmul.f32 %v1019, %v1084
  %v1095 = vmul.f32 %v1023, %v1084
  %v1096 = vmul.f32 %v1027, %v1084
  %v1097 = vmul.f32 %v1031, %v1084
  %v1098 = vmul.f32 %v1035, %v1084
  %v1099 = vmul.f32 %v1039, %v1084
  %v1100 = vmul.f32 %v1043, %v1084
  %v1101 = vmul.f32 %v1047, %v1084
  %v1102 = vmul.f32 %v1051, %v1084
  %v1103 = vmul.f32 %v1055, %v1084
  %v1104 = vmul.f32 %v1059, %v1084
  %v1105 = vmul.f32 %v1063, %v1084
  %v1106 = vmul.f32 %v1067, %v1084
  %v1107 = vmul.f32 %v1071, %v1084
  %v1108 = vmul.f32 %v1075, %v1084
  %v1109 = vmul.f32 %v1079, %v1084
  %v1110 = vadd.f32 %v956, %v1085
  %v1111 = vadd.f32 %v957, %v1086
  %v1112 = vadd.f32 %v958, %v1087
  %v1113 = vadd.f32 %v959, %v1088
  %v1114 = vadd.f32 %v960, %v1089
  %v1115 = vadd.f32 %v961, %v1090
  %v1116 = vadd.f32 %v962, %v1091
  %v1117 = vadd.f32 %v963, %v1092
  %v1118 = vadd.f32 %v964, %v1093
  %v1119 = vadd.f32 %v965, %v1094
  %v1120 = vadd.f32 %v966, %v1095
  %v1121 = vadd.f32 %v967, %v1096
  %v1122 = vadd.f32 %v968, %v1097
  %v1123 = vadd.f32 %v969, %v1098
  %v1124 = vadd.f32 %v970, %v1099
  %v1125 = vadd.f32 %v971, %v1100
  %v1126 = vadd.f32 %v972, %v1101
  %v1127 = vadd.f32 %v973, %v1102
  %v1128 = vadd.f32 %v974, %v1103
  %v1129 = vadd.f32 %v975, %v1104
  %v1130 = vadd.f32 %v976, %v1105
  %v1131 = vadd.f32 %v977, %v1106
  %v1132 = vadd.f32 %v978, %v1107
  %v1133 = vadd.f32 %v979, %v1108
  %v1134 = vadd.f32 %v980, %v1109
  %1135 = vset.pattern.permute.xlu0 3
  %1136 = vperm.xlu0 %1135, %v648
  %v1137 = vpop.permute.xlu0 %1136
  %1139 = vset.pattern.permute.xlu0 3
  %1140 = vperm.xlu0 %1139, %v649
  %v1141 = vpop.permute.xlu0 %1140
  %1143 = vset.pattern.permute.xlu0 3
  %1144 = vperm.xlu0 %1143, %v650
  %v1145 = vpop.permute.xlu0 %1144
  %1147 = vset.pattern.permute.xlu0 3
  %1148 = vperm.xlu0 %1147, %v651
  %v1149 = vpop.permute.xlu0 %1148
  %1151 = vset.pattern.permute.xlu0 3
  %1152 = vperm.xlu0 %1151, %v652
  %v1153 = vpop.permute.xlu0 %1152
  %1155 = vset.pattern.permute.xlu0 3
  %1156 = vperm.xlu0 %1155, %v653
  %v1157 = vpop.permute.xlu0 %1156
  %1159 = vset.pattern.permute.xlu0 3
  %1160 = vperm.xlu0 %1159, %v654
  %v1161 = vpop.permute.xlu0 %1160
  %1163 = vset.pattern.permute.xlu0 3
  %1164 = vperm.xlu0 %1163, %v655
  %v1165 = vpop.permute.xlu0 %1164
  %1167 = vset.pattern.permute.xlu0 3
  %1168 = vperm.xlu0 %1167, %v656
  %v1169 = vpop.permute.xlu0 %1168
  %1171 = vset.pattern.permute.xlu0 3
  %1172 = vperm.xlu0 %1171, %v657
  %v1173 = vpop.permute.xlu0 %1172
  %1175 = vset.pattern.permute.xlu0 3
  %1176 = vperm.xlu0 %1175, %v658
  %v1177 = vpop.permute.xlu0 %1176
  %1179 = vset.pattern.permute.xlu0 3
  %1180 = vperm.xlu0 %1179, %v659
  %v1181 = vpop.permute.xlu0 %1180
  %1183 = vset.pattern.permute.xlu0 3
  %1184 = vperm.xlu0 %1183, %v660
  %v1185 = vpop.permute.xlu0 %1184
  %1187 = vset.pattern.permute.xlu0 3
  %1188 = vperm.xlu0 %1187, %v661
  %v1189 = vpop.permute.xlu0 %1188
  %1191 = vset.pattern.permute.xlu0 3
  %1192 = vperm.xlu0 %1191, %v662
  %v1193 = vpop.permute.xlu0 %1192
  %1195 = vset.pattern.permute.xlu0 3
  %1196 = vperm.xlu0 %1195, %v663
  %v1197 = vpop.permute.xlu0 %1196
  %1199 = vset.pattern.permute.xlu0 3
  %1200 = vperm.xlu0 %1199, %v664
  %v1201 = vpop.permute.xlu0 %1200
  %1203 = vset.pattern.permute.xlu0 3
  %1204 = vperm.xlu0 %1203, %v665
  %v1205 = vpop.permute.xlu0 %1204
  %1207 = vset.pattern.permute.xlu0 3
  %1208 = vperm.xlu0 %1207, %v666
  %v1209 = vpop.permute.xlu0 %1208
  %1211 = vset.pattern.permute.xlu0 3
  %1212 = vperm.xlu0 %1211, %v667
  %v1213 = vpop.permute.xlu0 %1212
  %1215 = vset.pattern.permute.xlu0 3
  %1216 = vperm.xlu0 %1215, %v668
  %v1217 = vpop.permute.xlu0 %1216
  %1219 = vset.pattern.permute.xlu0 3
  %1220 = vperm.xlu0 %1219, %v669
  %v1221 = vpop.permute.xlu0 %1220
  %1223 = vset.pattern.permute.xlu0 3
  %1224 = vperm.xlu0 %1223, %v670
  %v1225 = vpop.permute.xlu0 %1224
  %1227 = vset.pattern.permute.xlu0 3
  %1228 = vperm.xlu0 %1227, %v671
  %v1229 = vpop.permute.xlu0 %1228
  %1231 = vset.pattern.permute.xlu0 3
  %1232 = vperm.xlu0 %1231, %v672
  %v1233 = vpop.permute.xlu0 %1232
  %v1235 = vlaneseq
  %v1236 = vshrl.u32 %v1235, 7
  %v1237 = vsub.s32 3, %v1236
  %v1238 = vrot.slane %v46, %v1237
  %v1239 = vmul.f32 %v1137, %v1238
  %v1240 = vmul.f32 %v1141, %v1238
  %v1241 = vmul.f32 %v1145, %v1238
  %v1242 = vmul.f32 %v1149, %v1238
  %v1243 = vmul.f32 %v1153, %v1238
  %v1244 = vmul.f32 %v1157, %v1238
  %v1245 = vmul.f32 %v1161, %v1238
  %v1246 = vmul.f32 %v1165, %v1238
  %v1247 = vmul.f32 %v1169, %v1238
  %v1248 = vmul.f32 %v1173, %v1238
  %v1249 = vmul.f32 %v1177, %v1238
  %v1250 = vmul.f32 %v1181, %v1238
  %v1251 = vmul.f32 %v1185, %v1238
  %v1252 = vmul.f32 %v1189, %v1238
  %v1253 = vmul.f32 %v1193, %v1238
  %v1254 = vmul.f32 %v1197, %v1238
  %v1255 = vmul.f32 %v1201, %v1238
  %v1256 = vmul.f32 %v1205, %v1238
  %v1257 = vmul.f32 %v1209, %v1238
  %v1258 = vmul.f32 %v1213, %v1238
  %v1259 = vmul.f32 %v1217, %v1238
  %v1260 = vmul.f32 %v1221, %v1238
  %v1261 = vmul.f32 %v1225, %v1238
  %v1262 = vmul.f32 %v1229, %v1238
  %v1263 = vmul.f32 %v1233, %v1238
  %v1264 = vadd.f32 %v1110, %v1239
  %v1265 = vadd.f32 %v1111, %v1240
  %v1266 = vadd.f32 %v1112, %v1241
  %v1267 = vadd.f32 %v1113, %v1242
  %v1268 = vadd.f32 %v1114, %v1243
  %v1269 = vadd.f32 %v1115, %v1244
  %v1270 = vadd.f32 %v1116, %v1245
  %v1271 = vadd.f32 %v1117, %v1246
  %v1272 = vadd.f32 %v1118, %v1247
  %v1273 = vadd.f32 %v1119, %v1248
  %v1274 = vadd.f32 %v1120, %v1249
  %v1275 = vadd.f32 %v1121, %v1250
  %v1276 = vadd.f32 %v1122, %v1251
  %v1277 = vadd.f32 %v1123, %v1252
  %v1278 = vadd.f32 %v1124, %v1253
  %v1279 = vadd.f32 %v1125, %v1254
  %v1280 = vadd.f32 %v1126, %v1255
  %v1281 = vadd.f32 %v1127, %v1256
  %v1282 = vadd.f32 %v1128, %v1257
  %v1283 = vadd.f32 %v1129, %v1258
  %v1284 = vadd.f32 %v1130, %v1259
  %v1285 = vadd.f32 %v1131, %v1260
  %v1286 = vadd.f32 %v1132, %v1261
  %v1287 = vadd.f32 %v1133, %v1262
  %v1288 = vadd.f32 %v1134, %v1263
  %1289 = vset.pattern.permute.xlu0 4
  %1290 = vperm.xlu0 %1289, %v648
  %v1291 = vpop.permute.xlu0 %1290
  %1293 = vset.pattern.permute.xlu0 4
  %1294 = vperm.xlu0 %1293, %v649
  %v1295 = vpop.permute.xlu0 %1294
  %1297 = vset.pattern.permute.xlu0 4
  %1298 = vperm.xlu0 %1297, %v650
  %v1299 = vpop.permute.xlu0 %1298
  %1301 = vset.pattern.permute.xlu0 4
  %1302 = vperm.xlu0 %1301, %v651
  %v1303 = vpop.permute.xlu0 %1302
  %1305 = vset.pattern.permute.xlu0 4
  %1306 = vperm.xlu0 %1305, %v652
  %v1307 = vpop.permute.xlu0 %1306
  %1309 = vset.pattern.permute.xlu0 4
  %1310 = vperm.xlu0 %1309, %v653
  %v1311 = vpop.permute.xlu0 %1310
  %1313 = vset.pattern.permute.xlu0 4
  %1314 = vperm.xlu0 %1313, %v654
  %v1315 = vpop.permute.xlu0 %1314
  %1317 = vset.pattern.permute.xlu0 4
  %1318 = vperm.xlu0 %1317, %v655
  %v1319 = vpop.permute.xlu0 %1318
  %1321 = vset.pattern.permute.xlu0 4
  %1322 = vperm.xlu0 %1321, %v656
  %v1323 = vpop.permute.xlu0 %1322
  %1325 = vset.pattern.permute.xlu0 4
  %1326 = vperm.xlu0 %1325, %v657
  %v1327 = vpop.permute.xlu0 %1326
  %1329 = vset.pattern.permute.xlu0 4
  %1330 = vperm.xlu0 %1329, %v658
  %v1331 = vpop.permute.xlu0 %1330
  %1333 = vset.pattern.permute.xlu0 4
  %1334 = vperm.xlu0 %1333, %v659
  %v1335 = vpop.permute.xlu0 %1334
  %1337 = vset.pattern.permute.xlu0 4
  %1338 = vperm.xlu0 %1337, %v660
  %v1339 = vpop.permute.xlu0 %1338
  %1341 = vset.pattern.permute.xlu0 4
  %1342 = vperm.xlu0 %1341, %v661
  %v1343 = vpop.permute.xlu0 %1342
  %1345 = vset.pattern.permute.xlu0 4
  %1346 = vperm.xlu0 %1345, %v662
  %v1347 = vpop.permute.xlu0 %1346
  %1349 = vset.pattern.permute.xlu0 4
  %1350 = vperm.xlu0 %1349, %v663
  %v1351 = vpop.permute.xlu0 %1350
  %1353 = vset.pattern.permute.xlu0 4
  %1354 = vperm.xlu0 %1353, %v664
  %v1355 = vpop.permute.xlu0 %1354
  %1357 = vset.pattern.permute.xlu0 4
  %1358 = vperm.xlu0 %1357, %v665
  %v1359 = vpop.permute.xlu0 %1358
  %1361 = vset.pattern.permute.xlu0 4
  %1362 = vperm.xlu0 %1361, %v666
  %v1363 = vpop.permute.xlu0 %1362
  %1365 = vset.pattern.permute.xlu0 4
  %1366 = vperm.xlu0 %1365, %v667
  %v1367 = vpop.permute.xlu0 %1366
  %1369 = vset.pattern.permute.xlu0 4
  %1370 = vperm.xlu0 %1369, %v668
  %v1371 = vpop.permute.xlu0 %1370
  %1373 = vset.pattern.permute.xlu0 4
  %1374 = vperm.xlu0 %1373, %v669
  %v1375 = vpop.permute.xlu0 %1374
  %1377 = vset.pattern.permute.xlu0 4
  %1378 = vperm.xlu0 %1377, %v670
  %v1379 = vpop.permute.xlu0 %1378
  %1381 = vset.pattern.permute.xlu0 4
  %1382 = vperm.xlu0 %1381, %v671
  %v1383 = vpop.permute.xlu0 %1382
  %1385 = vset.pattern.permute.xlu0 4
  %1386 = vperm.xlu0 %1385, %v672
  %v1387 = vpop.permute.xlu0 %1386
  %v1389 = vlaneseq
  %v1390 = vshrl.u32 %v1389, 7
  %v1391 = vsub.s32 4, %v1390
  %v1392 = vrot.slane %v46, %v1391
  %v1393 = vmul.f32 %v1291, %v1392
  %v1394 = vmul.f32 %v1295, %v1392
  %v1395 = vmul.f32 %v1299, %v1392
  %v1396 = vmul.f32 %v1303, %v1392
  %v1397 = vmul.f32 %v1307, %v1392
  %v1398 = vmul.f32 %v1311, %v1392
  %v1399 = vmul.f32 %v1315, %v1392
  %v1400 = vmul.f32 %v1319, %v1392
  %v1401 = vmul.f32 %v1323, %v1392
  %v1402 = vmul.f32 %v1327, %v1392
  %v1403 = vmul.f32 %v1331, %v1392
  %v1404 = vmul.f32 %v1335, %v1392
  %v1405 = vmul.f32 %v1339, %v1392
  %v1406 = vmul.f32 %v1343, %v1392
  %v1407 = vmul.f32 %v1347, %v1392
  %v1408 = vmul.f32 %v1351, %v1392
  %v1409 = vmul.f32 %v1355, %v1392
  %v1410 = vmul.f32 %v1359, %v1392
  %v1411 = vmul.f32 %v1363, %v1392
  %v1412 = vmul.f32 %v1367, %v1392
  %v1413 = vmul.f32 %v1371, %v1392
  %v1414 = vmul.f32 %v1375, %v1392
  %v1415 = vmul.f32 %v1379, %v1392
  %v1416 = vmul.f32 %v1383, %v1392
  %v1417 = vmul.f32 %v1387, %v1392
  %v1418 = vadd.f32 %v1264, %v1393
  %v1419 = vadd.f32 %v1265, %v1394
  %v1420 = vadd.f32 %v1266, %v1395
  %v1421 = vadd.f32 %v1267, %v1396
  %v1422 = vadd.f32 %v1268, %v1397
  %v1423 = vadd.f32 %v1269, %v1398
  %v1424 = vadd.f32 %v1270, %v1399
  %v1425 = vadd.f32 %v1271, %v1400
  %v1426 = vadd.f32 %v1272, %v1401
  %v1427 = vadd.f32 %v1273, %v1402
  %v1428 = vadd.f32 %v1274, %v1403
  %v1429 = vadd.f32 %v1275, %v1404
  %v1430 = vadd.f32 %v1276, %v1405
  %v1431 = vadd.f32 %v1277, %v1406
  %v1432 = vadd.f32 %v1278, %v1407
  %v1433 = vadd.f32 %v1279, %v1408
  %v1434 = vadd.f32 %v1280, %v1409
  %v1435 = vadd.f32 %v1281, %v1410
  %v1436 = vadd.f32 %v1282, %v1411
  %v1437 = vadd.f32 %v1283, %v1412
  %v1438 = vadd.f32 %v1284, %v1413
  %v1439 = vadd.f32 %v1285, %v1414
  %v1440 = vadd.f32 %v1286, %v1415
  %v1441 = vadd.f32 %v1287, %v1416
  %v1442 = vadd.f32 %v1288, %v1417
  %1443 = vset.pattern.permute.xlu0 5
  %1444 = vperm.xlu0 %1443, %v648
  %v1445 = vpop.permute.xlu0 %1444
  %1447 = vset.pattern.permute.xlu0 5
  %1448 = vperm.xlu0 %1447, %v649
  %v1449 = vpop.permute.xlu0 %1448
  %1451 = vset.pattern.permute.xlu0 5
  %1452 = vperm.xlu0 %1451, %v650
  %v1453 = vpop.permute.xlu0 %1452
  %1455 = vset.pattern.permute.xlu0 5
  %1456 = vperm.xlu0 %1455, %v651
  %v1457 = vpop.permute.xlu0 %1456
  %1459 = vset.pattern.permute.xlu0 5
  %1460 = vperm.xlu0 %1459, %v652
  %v1461 = vpop.permute.xlu0 %1460
  %1463 = vset.pattern.permute.xlu0 5
  %1464 = vperm.xlu0 %1463, %v653
  %v1465 = vpop.permute.xlu0 %1464
  %1467 = vset.pattern.permute.xlu0 5
  %1468 = vperm.xlu0 %1467, %v654
  %v1469 = vpop.permute.xlu0 %1468
  %1471 = vset.pattern.permute.xlu0 5
  %1472 = vperm.xlu0 %1471, %v655
  %v1473 = vpop.permute.xlu0 %1472
  %1475 = vset.pattern.permute.xlu0 5
  %1476 = vperm.xlu0 %1475, %v656
  %v1477 = vpop.permute.xlu0 %1476
  %1479 = vset.pattern.permute.xlu0 5
  %1480 = vperm.xlu0 %1479, %v657
  %v1481 = vpop.permute.xlu0 %1480
  %1483 = vset.pattern.permute.xlu0 5
  %1484 = vperm.xlu0 %1483, %v658
  %v1485 = vpop.permute.xlu0 %1484
  %1487 = vset.pattern.permute.xlu0 5
  %1488 = vperm.xlu0 %1487, %v659
  %v1489 = vpop.permute.xlu0 %1488
  %1491 = vset.pattern.permute.xlu0 5
  %1492 = vperm.xlu0 %1491, %v660
  %v1493 = vpop.permute.xlu0 %1492
  %1495 = vset.pattern.permute.xlu0 5
  %1496 = vperm.xlu0 %1495, %v661
  %v1497 = vpop.permute.xlu0 %1496
  %1499 = vset.pattern.permute.xlu0 5
  %1500 = vperm.xlu0 %1499, %v662
  %v1501 = vpop.permute.xlu0 %1500
  %1503 = vset.pattern.permute.xlu0 5
  %1504 = vperm.xlu0 %1503, %v663
  %v1505 = vpop.permute.xlu0 %1504
  %1507 = vset.pattern.permute.xlu0 5
  %1508 = vperm.xlu0 %1507, %v664
  %v1509 = vpop.permute.xlu0 %1508
  %1511 = vset.pattern.permute.xlu0 5
  %1512 = vperm.xlu0 %1511, %v665
  %v1513 = vpop.permute.xlu0 %1512
  %1515 = vset.pattern.permute.xlu0 5
  %1516 = vperm.xlu0 %1515, %v666
  %v1517 = vpop.permute.xlu0 %1516
  %1519 = vset.pattern.permute.xlu0 5
  %1520 = vperm.xlu0 %1519, %v667
  %v1521 = vpop.permute.xlu0 %1520
  %1523 = vset.pattern.permute.xlu0 5
  %1524 = vperm.xlu0 %1523, %v668
  %v1525 = vpop.permute.xlu0 %1524
  %1527 = vset.pattern.permute.xlu0 5
  %1528 = vperm.xlu0 %1527, %v669
  %v1529 = vpop.permute.xlu0 %1528
  %1531 = vset.pattern.permute.xlu0 5
  %1532 = vperm.xlu0 %1531, %v670
  %v1533 = vpop.permute.xlu0 %1532
  %1535 = vset.pattern.permute.xlu0 5
  %1536 = vperm.xlu0 %1535, %v671
  %v1537 = vpop.permute.xlu0 %1536
  %1539 = vset.pattern.permute.xlu0 5
  %1540 = vperm.xlu0 %1539, %v672
  %v1541 = vpop.permute.xlu0 %1540
  %v1543 = vlaneseq
  %v1544 = vshrl.u32 %v1543, 7
  %v1545 = vsub.s32 5, %v1544
  %v1546 = vrot.slane %v46, %v1545
  %v1547 = vmul.f32 %v1445, %v1546
  %v1548 = vmul.f32 %v1449, %v1546
  %v1549 = vmul.f32 %v1453, %v1546
  %v1550 = vmul.f32 %v1457, %v1546
  %v1551 = vmul.f32 %v1461, %v1546
  %v1552 = vmul.f32 %v1465, %v1546
  %v1553 = vmul.f32 %v1469, %v1546
  %v1554 = vmul.f32 %v1473, %v1546
  %v1555 = vmul.f32 %v1477, %v1546
  %v1556 = vmul.f32 %v1481, %v1546
  %v1557 = vmul.f32 %v1485, %v1546
  %v1558 = vmul.f32 %v1489, %v1546
  %v1559 = vmul.f32 %v1493, %v1546
  %v1560 = vmul.f32 %v1497, %v1546
  %v1561 = vmul.f32 %v1501, %v1546
  %v1562 = vmul.f32 %v1505, %v1546
  %v1563 = vmul.f32 %v1509, %v1546
  %v1564 = vmul.f32 %v1513, %v1546
  %v1565 = vmul.f32 %v1517, %v1546
  %v1566 = vmul.f32 %v1521, %v1546
  %v1567 = vmul.f32 %v1525, %v1546
  %v1568 = vmul.f32 %v1529, %v1546
  %v1569 = vmul.f32 %v1533, %v1546
  %v1570 = vmul.f32 %v1537, %v1546
  %v1571 = vmul.f32 %v1541, %v1546
  %v1572 = vadd.f32 %v1418, %v1547
  %v1573 = vadd.f32 %v1419, %v1548
  %v1574 = vadd.f32 %v1420, %v1549
  %v1575 = vadd.f32 %v1421, %v1550
  %v1576 = vadd.f32 %v1422, %v1551
  %v1577 = vadd.f32 %v1423, %v1552
  %v1578 = vadd.f32 %v1424, %v1553
  %v1579 = vadd.f32 %v1425, %v1554
  %v1580 = vadd.f32 %v1426, %v1555
  %v1581 = vadd.f32 %v1427, %v1556
  %v1582 = vadd.f32 %v1428, %v1557
  %v1583 = vadd.f32 %v1429, %v1558
  %v1584 = vadd.f32 %v1430, %v1559
  %v1585 = vadd.f32 %v1431, %v1560
  %v1586 = vadd.f32 %v1432, %v1561
  %v1587 = vadd.f32 %v1433, %v1562
  %v1588 = vadd.f32 %v1434, %v1563
  %v1589 = vadd.f32 %v1435, %v1564
  %v1590 = vadd.f32 %v1436, %v1565
  %v1591 = vadd.f32 %v1437, %v1566
  %v1592 = vadd.f32 %v1438, %v1567
  %v1593 = vadd.f32 %v1439, %v1568
  %v1594 = vadd.f32 %v1440, %v1569
  %v1595 = vadd.f32 %v1441, %v1570
  %v1596 = vadd.f32 %v1442, %v1571
  %1597 = vset.pattern.permute.xlu0 6
  %1598 = vperm.xlu0 %1597, %v648
  %v1599 = vpop.permute.xlu0 %1598
  %1601 = vset.pattern.permute.xlu0 6
  %1602 = vperm.xlu0 %1601, %v649
  %v1603 = vpop.permute.xlu0 %1602
  %1605 = vset.pattern.permute.xlu0 6
  %1606 = vperm.xlu0 %1605, %v650
  %v1607 = vpop.permute.xlu0 %1606
  %1609 = vset.pattern.permute.xlu0 6
  %1610 = vperm.xlu0 %1609, %v651
  %v1611 = vpop.permute.xlu0 %1610
  %1613 = vset.pattern.permute.xlu0 6
  %1614 = vperm.xlu0 %1613, %v652
  %v1615 = vpop.permute.xlu0 %1614
  %1617 = vset.pattern.permute.xlu0 6
  %1618 = vperm.xlu0 %1617, %v653
  %v1619 = vpop.permute.xlu0 %1618
  %1621 = vset.pattern.permute.xlu0 6
  %1622 = vperm.xlu0 %1621, %v654
  %v1623 = vpop.permute.xlu0 %1622
  %1625 = vset.pattern.permute.xlu0 6
  %1626 = vperm.xlu0 %1625, %v655
  %v1627 = vpop.permute.xlu0 %1626
  %1629 = vset.pattern.permute.xlu0 6
  %1630 = vperm.xlu0 %1629, %v656
  %v1631 = vpop.permute.xlu0 %1630
  %1633 = vset.pattern.permute.xlu0 6
  %1634 = vperm.xlu0 %1633, %v657
  %v1635 = vpop.permute.xlu0 %1634
  %1637 = vset.pattern.permute.xlu0 6
  %1638 = vperm.xlu0 %1637, %v658
  %v1639 = vpop.permute.xlu0 %1638
  %1641 = vset.pattern.permute.xlu0 6
  %1642 = vperm.xlu0 %1641, %v659
  %v1643 = vpop.permute.xlu0 %1642
  %1645 = vset.pattern.permute.xlu0 6
  %1646 = vperm.xlu0 %1645, %v660
  %v1647 = vpop.permute.xlu0 %1646
  %1649 = vset.pattern.permute.xlu0 6
  %1650 = vperm.xlu0 %1649, %v661
  %v1651 = vpop.permute.xlu0 %1650
  %1653 = vset.pattern.permute.xlu0 6
  %1654 = vperm.xlu0 %1653, %v662
  %v1655 = vpop.permute.xlu0 %1654
  %1657 = vset.pattern.permute.xlu0 6
  %1658 = vperm.xlu0 %1657, %v663
  %v1659 = vpop.permute.xlu0 %1658
  %1661 = vset.pattern.permute.xlu0 6
  %1662 = vperm.xlu0 %1661, %v664
  %v1663 = vpop.permute.xlu0 %1662
  %1665 = vset.pattern.permute.xlu0 6
  %1666 = vperm.xlu0 %1665, %v665
  %v1667 = vpop.permute.xlu0 %1666
  %1669 = vset.pattern.permute.xlu0 6
  %1670 = vperm.xlu0 %1669, %v666
  %v1671 = vpop.permute.xlu0 %1670
  %1673 = vset.pattern.permute.xlu0 6
  %1674 = vperm.xlu0 %1673, %v667
  %v1675 = vpop.permute.xlu0 %1674
  %1677 = vset.pattern.permute.xlu0 6
  %1678 = vperm.xlu0 %1677, %v668
  %v1679 = vpop.permute.xlu0 %1678
  %1681 = vset.pattern.permute.xlu0 6
  %1682 = vperm.xlu0 %1681, %v669
  %v1683 = vpop.permute.xlu0 %1682
  %1685 = vset.pattern.permute.xlu0 6
  %1686 = vperm.xlu0 %1685, %v670
  %v1687 = vpop.permute.xlu0 %1686
  %1689 = vset.pattern.permute.xlu0 6
  %1690 = vperm.xlu0 %1689, %v671
  %v1691 = vpop.permute.xlu0 %1690
  %1693 = vset.pattern.permute.xlu0 6
  %1694 = vperm.xlu0 %1693, %v672
  %v1695 = vpop.permute.xlu0 %1694
  %v1697 = vlaneseq
  %v1698 = vshrl.u32 %v1697, 7
  %v1699 = vsub.s32 6, %v1698
  %v1700 = vrot.slane %v46, %v1699
  %v1701 = vmul.f32 %v1599, %v1700
  %v1702 = vmul.f32 %v1603, %v1700
  %v1703 = vmul.f32 %v1607, %v1700
  %v1704 = vmul.f32 %v1611, %v1700
  %v1705 = vmul.f32 %v1615, %v1700
  %v1706 = vmul.f32 %v1619, %v1700
  %v1707 = vmul.f32 %v1623, %v1700
  %v1708 = vmul.f32 %v1627, %v1700
  %v1709 = vmul.f32 %v1631, %v1700
  %v1710 = vmul.f32 %v1635, %v1700
  %v1711 = vmul.f32 %v1639, %v1700
  %v1712 = vmul.f32 %v1643, %v1700
  %v1713 = vmul.f32 %v1647, %v1700
  %v1714 = vmul.f32 %v1651, %v1700
  %v1715 = vmul.f32 %v1655, %v1700
  %v1716 = vmul.f32 %v1659, %v1700
  %v1717 = vmul.f32 %v1663, %v1700
  %v1718 = vmul.f32 %v1667, %v1700
  %v1719 = vmul.f32 %v1671, %v1700
  %v1720 = vmul.f32 %v1675, %v1700
  %v1721 = vmul.f32 %v1679, %v1700
  %v1722 = vmul.f32 %v1683, %v1700
  %v1723 = vmul.f32 %v1687, %v1700
  %v1724 = vmul.f32 %v1691, %v1700
  %v1725 = vmul.f32 %v1695, %v1700
  %v1726 = vadd.f32 %v1572, %v1701
  %v1727 = vadd.f32 %v1573, %v1702
  %v1728 = vadd.f32 %v1574, %v1703
  %v1729 = vadd.f32 %v1575, %v1704
  %v1730 = vadd.f32 %v1576, %v1705
  %v1731 = vadd.f32 %v1577, %v1706
  %v1732 = vadd.f32 %v1578, %v1707
  %v1733 = vadd.f32 %v1579, %v1708
  %v1734 = vadd.f32 %v1580, %v1709
  %v1735 = vadd.f32 %v1581, %v1710
  %v1736 = vadd.f32 %v1582, %v1711
  %v1737 = vadd.f32 %v1583, %v1712
  %v1738 = vadd.f32 %v1584, %v1713
  %v1739 = vadd.f32 %v1585, %v1714
  %v1740 = vadd.f32 %v1586, %v1715
  %v1741 = vadd.f32 %v1587, %v1716
  %v1742 = vadd.f32 %v1588, %v1717
  %v1743 = vadd.f32 %v1589, %v1718
  %v1744 = vadd.f32 %v1590, %v1719
  %v1745 = vadd.f32 %v1591, %v1720
  %v1746 = vadd.f32 %v1592, %v1721
  %v1747 = vadd.f32 %v1593, %v1722
  %v1748 = vadd.f32 %v1594, %v1723
  %v1749 = vadd.f32 %v1595, %v1724
  %v1750 = vadd.f32 %v1596, %v1725
  %1751 = vset.pattern.permute.xlu0 7
  %1752 = vperm.xlu0 %1751, %v648
  %v1753 = vpop.permute.xlu0 %1752
  %1755 = vset.pattern.permute.xlu0 7
  %1756 = vperm.xlu0 %1755, %v649
  %v1757 = vpop.permute.xlu0 %1756
  %1759 = vset.pattern.permute.xlu0 7
  %1760 = vperm.xlu0 %1759, %v650
  %v1761 = vpop.permute.xlu0 %1760
  %1763 = vset.pattern.permute.xlu0 7
  %1764 = vperm.xlu0 %1763, %v651
  %v1765 = vpop.permute.xlu0 %1764
  %1767 = vset.pattern.permute.xlu0 7
  %1768 = vperm.xlu0 %1767, %v652
  %v1769 = vpop.permute.xlu0 %1768
  %1771 = vset.pattern.permute.xlu0 7
  %1772 = vperm.xlu0 %1771, %v653
  %v1773 = vpop.permute.xlu0 %1772
  %1775 = vset.pattern.permute.xlu0 7
  %1776 = vperm.xlu0 %1775, %v654
  %v1777 = vpop.permute.xlu0 %1776
  %1779 = vset.pattern.permute.xlu0 7
  %1780 = vperm.xlu0 %1779, %v655
  %v1781 = vpop.permute.xlu0 %1780
  %1783 = vset.pattern.permute.xlu0 7
  %1784 = vperm.xlu0 %1783, %v656
  %v1785 = vpop.permute.xlu0 %1784
  %1787 = vset.pattern.permute.xlu0 7
  %1788 = vperm.xlu0 %1787, %v657
  %v1789 = vpop.permute.xlu0 %1788
  %1791 = vset.pattern.permute.xlu0 7
  %1792 = vperm.xlu0 %1791, %v658
  %v1793 = vpop.permute.xlu0 %1792
  %1795 = vset.pattern.permute.xlu0 7
  %1796 = vperm.xlu0 %1795, %v659
  %v1797 = vpop.permute.xlu0 %1796
  %1799 = vset.pattern.permute.xlu0 7
  %1800 = vperm.xlu0 %1799, %v660
  %v1801 = vpop.permute.xlu0 %1800
  %1803 = vset.pattern.permute.xlu0 7
  %1804 = vperm.xlu0 %1803, %v661
  %v1805 = vpop.permute.xlu0 %1804
  %1807 = vset.pattern.permute.xlu0 7
  %1808 = vperm.xlu0 %1807, %v662
  %v1809 = vpop.permute.xlu0 %1808
  %1811 = vset.pattern.permute.xlu0 7
  %1812 = vperm.xlu0 %1811, %v663
  %v1813 = vpop.permute.xlu0 %1812
  %1815 = vset.pattern.permute.xlu0 7
  %1816 = vperm.xlu0 %1815, %v664
  %v1817 = vpop.permute.xlu0 %1816
  %1819 = vset.pattern.permute.xlu0 7
  %1820 = vperm.xlu0 %1819, %v665
  %v1821 = vpop.permute.xlu0 %1820
  %1823 = vset.pattern.permute.xlu0 7
  %1824 = vperm.xlu0 %1823, %v666
  %v1825 = vpop.permute.xlu0 %1824
  %1827 = vset.pattern.permute.xlu0 7
  %1828 = vperm.xlu0 %1827, %v667
  %v1829 = vpop.permute.xlu0 %1828
  %1831 = vset.pattern.permute.xlu0 7
  %1832 = vperm.xlu0 %1831, %v668
  %v1833 = vpop.permute.xlu0 %1832
  %1835 = vset.pattern.permute.xlu0 7
  %1836 = vperm.xlu0 %1835, %v669
  %v1837 = vpop.permute.xlu0 %1836
  %1839 = vset.pattern.permute.xlu0 7
  %1840 = vperm.xlu0 %1839, %v670
  %v1841 = vpop.permute.xlu0 %1840
  %1843 = vset.pattern.permute.xlu0 7
  %1844 = vperm.xlu0 %1843, %v671
  %v1845 = vpop.permute.xlu0 %1844
  %1847 = vset.pattern.permute.xlu0 7
  %1848 = vperm.xlu0 %1847, %v672
  %v1849 = vpop.permute.xlu0 %1848
  %v1851 = vlaneseq
  %v1852 = vshrl.u32 %v1851, 7
  %v1853 = vsub.s32 7, %v1852
  %v1854 = vrot.slane %v46, %v1853
  %v1855 = vmul.f32 %v1753, %v1854
  %v1856 = vmul.f32 %v1757, %v1854
  %v1857 = vmul.f32 %v1761, %v1854
  %v1858 = vmul.f32 %v1765, %v1854
  %v1859 = vmul.f32 %v1769, %v1854
  %v1860 = vmul.f32 %v1773, %v1854
  %v1861 = vmul.f32 %v1777, %v1854
  %v1862 = vmul.f32 %v1781, %v1854
  %v1863 = vmul.f32 %v1785, %v1854
  %v1864 = vmul.f32 %v1789, %v1854
  %v1865 = vmul.f32 %v1793, %v1854
  %v1866 = vmul.f32 %v1797, %v1854
  %v1867 = vmul.f32 %v1801, %v1854
  %v1868 = vmul.f32 %v1805, %v1854
  %v1869 = vmul.f32 %v1809, %v1854
  %v1870 = vmul.f32 %v1813, %v1854
  %v1871 = vmul.f32 %v1817, %v1854
  %v1872 = vmul.f32 %v1821, %v1854
  %v1873 = vmul.f32 %v1825, %v1854
  %v1874 = vmul.f32 %v1829, %v1854
  %v1875 = vmul.f32 %v1833, %v1854
  %v1876 = vmul.f32 %v1837, %v1854
  %v1877 = vmul.f32 %v1841, %v1854
  %v1878 = vmul.f32 %v1845, %v1854
  %v1879 = vmul.f32 %v1849, %v1854
  %v1880 = vadd.f32 %v1726, %v1855
  %v1881 = vadd.f32 %v1727, %v1856
  %v1882 = vadd.f32 %v1728, %v1857
  %v1883 = vadd.f32 %v1729, %v1858
  %v1884 = vadd.f32 %v1730, %v1859
  %v1885 = vadd.f32 %v1731, %v1860
  %v1886 = vadd.f32 %v1732, %v1861
  %v1887 = vadd.f32 %v1733, %v1862
  %v1888 = vadd.f32 %v1734, %v1863
  %v1889 = vadd.f32 %v1735, %v1864
  %v1890 = vadd.f32 %v1736, %v1865
  %v1891 = vadd.f32 %v1737, %v1866
  %v1892 = vadd.f32 %v1738, %v1867
  %v1893 = vadd.f32 %v1739, %v1868
  %v1894 = vadd.f32 %v1740, %v1869
  %v1895 = vadd.f32 %v1741, %v1870
  %v1896 = vadd.f32 %v1742, %v1871
  %v1897 = vadd.f32 %v1743, %v1872
  %v1898 = vadd.f32 %v1744, %v1873
  %v1899 = vadd.f32 %v1745, %v1874
  %v1900 = vadd.f32 %v1746, %v1875
  %v1901 = vadd.f32 %v1747, %v1876
  %v1902 = vadd.f32 %v1748, %v1877
  %v1903 = vadd.f32 %v1749, %v1878
  %v1904 = vadd.f32 %v1750, %v1879
  %1905 = vst.msk [vmem:[%s4] sm:$0xff] %vm53, %v1880
  %1906 = vst.msk [vmem:[%s4 + $0x8] sm:$0xff] %vm53, %v1881
  %1907 = vst.msk [vmem:[%s4 + $0x10] sm:$0xff] %vm53, %v1882
  %1908 = vst.msk [vmem:[%s4 + $0x18] sm:$0xff] %vm53, %v1883
  %1909 = vst.msk [vmem:[%s4 + $0x20] sm:$0xff] %vm53, %v1884
  %1910 = vst.msk [vmem:[%s4 + $0x28] sm:$0xff] %vm53, %v1885
  %1911 = vst.msk [vmem:[%s4 + $0x30] sm:$0xff] %vm53, %v1886
  %1912 = vst.msk [vmem:[%s4 + $0x38] sm:$0xff] %vm53, %v1887
  %1913 = vst.msk [vmem:[%s4 + $0x40] sm:$0xff] %vm53, %v1888
  %1914 = vst.msk [vmem:[%s4 + $0x48] sm:$0xff] %vm53, %v1889
  %1915 = vst.msk [vmem:[%s4 + $0x50] sm:$0xff] %vm53, %v1890
  %1916 = vst.msk [vmem:[%s4 + $0x58] sm:$0xff] %vm53, %v1891
  %1917 = vst.msk [vmem:[%s4 + $0x60] sm:$0xff] %vm53, %v1892
  %1918 = vst.msk [vmem:[%s4 + $0x68] sm:$0xff] %vm53, %v1893
  %1919 = vst.msk [vmem:[%s4 + $0x70] sm:$0xff] %vm53, %v1894
  %1920 = vst.msk [vmem:[%s4 + $0x78] sm:$0xff] %vm53, %v1895
  %1921 = vst.msk [vmem:[%s4 + $0x80] sm:$0xff] %vm53, %v1896
  %1922 = vst.msk [vmem:[%s4 + $0x88] sm:$0xff] %vm53, %v1897
  %1923 = vst.msk [vmem:[%s4 + $0x90] sm:$0xff] %vm53, %v1898
  %1924 = vst.msk [vmem:[%s4 + $0x98] sm:$0xff] %vm53, %v1899
  %1925 = vst.msk [vmem:[%s4 + $0xa0] sm:$0xff] %vm53, %v1900
  %1926 = vst.msk [vmem:[%s4 + $0xa8] sm:$0xff] %vm53, %v1901
  %1927 = vst.msk [vmem:[%s4 + $0xb0] sm:$0xff] %vm53, %v1902
  %1928 = vst.msk [vmem:[%s4 + $0xb8] sm:$0xff] %vm53, %v1903
  %1929 = vst.msk [vmem:[%s4 + $0xc0] sm:$0xff] %vm53, %v1904
  %1930 = vst.msk [vmem:[%s5] sm:$0xff] %vm322, %v648
  %1931 = vst.msk [vmem:[%s5 + $0x8] sm:$0xff] %vm322, %v649
  %1932 = vst.msk [vmem:[%s5 + $0x10] sm:$0xff] %vm322, %v650
  %1933 = vst.msk [vmem:[%s5 + $0x18] sm:$0xff] %vm322, %v651
  %1934 = vst.msk [vmem:[%s5 + $0x20] sm:$0xff] %vm322, %v652
  %1935 = vst.msk [vmem:[%s5 + $0x28] sm:$0xff] %vm322, %v653
  %1936 = vst.msk [vmem:[%s5 + $0x30] sm:$0xff] %vm322, %v654
  %1937 = vst.msk [vmem:[%s5 + $0x38] sm:$0xff] %vm322, %v655
  %1938 = vst.msk [vmem:[%s5 + $0x40] sm:$0xff] %vm322, %v656
  %1939 = vst.msk [vmem:[%s5 + $0x48] sm:$0xff] %vm322, %v657
  %1940 = vst.msk [vmem:[%s5 + $0x50] sm:$0xff] %vm322, %v658
  %1941 = vst.msk [vmem:[%s5 + $0x58] sm:$0xff] %vm322, %v659
  %1942 = vst.msk [vmem:[%s5 + $0x60] sm:$0xff] %vm322, %v660
  %1943 = vst.msk [vmem:[%s5 + $0x68] sm:$0xff] %vm322, %v661
  %1944 = vst.msk [vmem:[%s5 + $0x70] sm:$0xff] %vm322, %v662
  %1945 = vst.msk [vmem:[%s5 + $0x78] sm:$0xff] %vm322, %v663
  %1946 = vst.msk [vmem:[%s5 + $0x80] sm:$0xff] %vm322, %v664
  %1947 = vst.msk [vmem:[%s5 + $0x88] sm:$0xff] %vm322, %v665
  %1948 = vst.msk [vmem:[%s5 + $0x90] sm:$0xff] %vm322, %v666
  %1949 = vst.msk [vmem:[%s5 + $0x98] sm:$0xff] %vm322, %v667
  %1950 = vst.msk [vmem:[%s5 + $0xa0] sm:$0xff] %vm322, %v668
  %1951 = vst.msk [vmem:[%s5 + $0xa8] sm:$0xff] %vm322, %v669
  %1952 = vst.msk [vmem:[%s5 + $0xb0] sm:$0xff] %vm322, %v670
  %1953 = vst.msk [vmem:[%s5 + $0xb8] sm:$0xff] %vm322, %v671
  %1954 = vst.msk [vmem:[%s5 + $0xc0] sm:$0xff] %vm322, %v672
  // Predicated region
  $region18: #{entailment_memory_forward.1} parent=0 // pred_check
    _
  $region19: #{entailment_memory_forward.1} parent=0 // pred_check_branch
    %1956 = sbr.rel (0) target = $region21
  $region20: #{entailment_memory_forward.1} parent=0 // pred_region
    _
  $region21: #{entailment_memory_forward.1} parent=0 // pred_fallthru
    _
  // Predicated region
  $region22: #{entailment_memory_forward.1} parent=0 // pred_check
    _
  $region23: #{entailment_memory_forward.1} parent=0 // pred_check_branch
    %1958 = sbr.rel (0) target = $region25
  $region24: #{entailment_memory_forward.1} parent=0 // pred_region
    _
  $region25: #{entailment_memory_forward.1} parent=0 // pred_fallthru
    _
  // Predicated region
  $region26: #{entailment_memory_forward.1} parent=0 // pred_check
    _
  $region27: #{entailment_memory_forward.1} parent=0 // pred_check_branch
    %1960 = sbr.rel (0) target = $region29
  $region28: #{entailment_memory_forward.1} parent=0 // pred_region
    _
  $region29: #{entailment_memory_forward.1} parent=0 // pred_fallthru
    _
  // Predicated region
  $region30: #{entailment_memory_forward.1} parent=0 // pred_check
    _
  $region31: #{entailment_memory_forward.1} parent=0 // pred_check_branch
    %1962 = sbr.rel (0) target = $region33
  $region32: #{entailment_memory_forward.1} parent=0 // pred_region
    _
  $region33: #{entailment_memory_forward.1} parent=0 // pred_fallthru
    _

</llo_original>
